<compile_context>
chip_gen: v6e
topology: v6e:2x2x1
jax: 0.10.0
libtpu: 0.0.40
codegen_flags: <defaults>
</compile_context>

<pallas_src>
import jax
import jax.numpy as jnp
from jax.experimental import pallas as pl
from jax.experimental.pallas import tpu as pltpu

# ---------------- model hyper-parameters (small, synthetic) ----------------
BS = 2
N_AGENTS = 3
N_ALLIES = 3                 # must equal n_agents for hidden_state reshape
N_ENEMIES = 4
N_ENTITIES = 1 + N_ALLIES + N_ENEMIES       # 8
OWN_F = 10
ALLY_F = 12
ENEMY_F = 14
HIDDEN = 32
N_HEAD = 4
HEAD_DIM = HIDDEN // N_HEAD
N_ACTIONS = 19               # q = cat(q_normal[:, :9], interact(3), q_normal[:, 9:])
BA = BS * N_AGENTS           # 6
BA_PAD = 8                   # batch*agents padded to a sublane multiple
F_TOT = OWN_F + ALLY_F + ENEMY_F            # 36 (block-diagonal feature width)
F_PAD64 = 64                 # feats + 3 type one-hot lanes, padded to 64 lanes
ROWS_E = BA_PAD * N_ENTITIES                # 64 entity rows per step

# ---- 128-lane-aligned column offsets inside the fused bf16 (64, WCOLS) slab ----
SEG_EMB = 0       # rows 0:40, width 32 : block-diag embedding (+ folded per-type biases)
SEG_QKV = 128     # rows 0:32, width 96 : [Wq | Wk | Wv]
SEG_WO = 256      # rows 0:32, width 32 : attention output projection
SEG_RFF = 384     # rows 0:32, width 32 : rFF of the MAB block
SEG_HSEL = 512    # rows 0:32, width 4  : head-selector (0/1) for per-head score reduce
SEG_GRU = 640     # rows 0:64, width 128: fused GRU gates [r | z | gi_n | gh_n]
SEG_N1 = 768      # rows 0:32, width 32 : normal_actions_net layer 1
SEG_N2 = 896      # rows 0:32, width 32 : normal_actions_net layer 2 (q-lane scattered)
SEG_I1 = 1024     # rows 0:32, width 32 : interact_action layer 1
SEG_I2 = 1152     # rows 0:32, width 32 : interact_action layer 2 (lanes 9:12)
WCOLS = 1280
W_ROWS = 2 * HIDDEN          # 64
AUX_ROWS = 8                 # row 0: biases; rows 1:5 @cols0:32 LN; rows 1:5 @SEG_HSEL segT

_FLOPS_PER_STEP = 2 * (
    ROWS_E * F_PAD64 * HIDDEN            # embedding
    + ROWS_E * HIDDEN * (3 * HIDDEN)     # qkv
    + ROWS_E * HIDDEN * N_HEAD           # per-head score reduce
    + ROWS_E * N_HEAD * HIDDEN           # head-weight broadcast
    + BA_PAD * HIDDEN * HIDDEN           # Wo
    + BA_PAD * HIDDEN * HIDDEN           # rFF
    + BA_PAD * (2 * HIDDEN) * (4 * HIDDEN)   # fused GRU
    + 2 * BA_PAD * HIDDEN * HIDDEN       # normal_actions_net
    + 2 * ROWS_E * HIDDEN * HIDDEN       # interact_action
)
_TRANS_PER_STEP = ROWS_E * N_HEAD + 3 * BA_PAD * HIDDEN + BA_PAD * N_HEAD + 4 * BA_PAD


def spectra_kernel(ent_ref, hid_ref, w_ref, aux_ref, out_ref, h_sc):
    t = pl.program_id(0)

    @pl.when(t == 0)
    def _():
        h_sc[...] = hid_ref[...]

    def bdot(x, w_bf16):                      # bf16 MXU dot, f32 accumulate
        return jnp.dot(x.astype(jnp.bfloat16), w_bf16,
                       preferred_element_type=jnp.float32)

    def w32(off, width):                      # 32-fan-in weight segment (bf16)
        return w_ref[0:HIDDEN, off:off + width]

    def bseg(off, width):                     # f32 bias row segment
        return aux_ref[0:1, off:off + width]

    def layer_norm(x, g, b, eps=1e-5):
        mu = jnp.mean(x, axis=-1, keepdims=True)
        var = jnp.mean((x - mu) ** 2, axis=-1, keepdims=True)
        return (x - mu) * jax.lax.rsqrt(var + eps) * g + b

    ent = ent_ref[...]                        # (ROWS_E, 64) bf16
    h_prev = h_sc[...]                        # (BA_PAD, H) f32

    # entity mask from the raw feature lanes only (one-hot / pad lanes excluded)
    mask = jnp.max(jnp.abs(ent[:, :F_TOT].astype(jnp.float32)),
                   axis=-1, keepdims=True) > 0.0
    mask3 = mask.reshape(BA_PAD, N_ENTITIES, 1)

    # single block-diagonal embedding matmul (per-type biases folded via one-hots)
    emb = jnp.dot(ent, w_ref[:, SEG_EMB:SEG_EMB + HIDDEN],
                  preferred_element_type=jnp.float32)        # (ROWS_E, H)
    emb3 = emb.reshape(BA_PAD, N_ENTITIES, HIDDEN)
    own_e = emb3[:, 0, :]                                    # (BA_PAD, H)

    # ---------------- SAQA cross-attention, all heads batched ----------------
    qkv = (bdot(emb, w32(SEG_QKV, 3 * HIDDEN)) + bseg(SEG_QKV, 3 * HIDDEN))
    qkv = qkv.reshape(BA_PAD, N_ENTITIES, 3 * HIDDEN)
    q_p = qkv[:, 0, 0:HIDDEN]                                # (BA_PAD, H)
    k_p = qkv[:, :, HIDDEN:2 * HIDDEN]                       # (BA_PAD, E, H)
    v_p = qkv[:, :, 2 * HIDDEN:3 * HIDDEN]                   # (BA_PAD, E, H)

    scale = 1.0 / (HEAD_DIM ** 0.5)
    qk = q_p.reshape(BA_PAD, 1, HIDDEN) * k_p                # (BA_PAD, E, H)
    scores = bdot(qk.reshape(ROWS_E, HIDDEN), w32(SEG_HSEL, N_HEAD)) * scale
    scores = scores.reshape(BA_PAD, N_ENTITIES, N_HEAD)
    scores = jnp.where(mask3, scores, -1e30)
    m = jnp.max(scores, axis=1, keepdims=True)
    p = jnp.exp(scores - m)
    l = jnp.sum(p, axis=1, keepdims=True)
    attw = p * pl.reciprocal(l, approx=True)                 # (BA_PAD, E, n_head)

    segT = aux_ref[1:1 + N_HEAD, SEG_HSEL:SEG_HSEL + HIDDEN]  # (n_head, H) f32 0/1
    attw_l = jnp.dot(attw.reshape(ROWS_E, N_HEAD), segT,
                     preferred_element_type=jnp.float32)
    attw_l = attw_l.reshape(BA_PAD, N_ENTITIES, HIDDEN)
    head_out = jnp.sum(attw_l * v_p, axis=1)                 # (BA_PAD, H)

    attn = bdot(head_out, w32(SEG_WO, HIDDEN)) + bseg(SEG_WO, HIDDEN)
    hq = layer_norm(own_e + attn, aux_ref[1:2, 0:HIDDEN], aux_ref[2:3, 0:HIDDEN])
    ff = jnp.maximum(bdot(hq, w32(SEG_RFF, HIDDEN)) + bseg(SEG_RFF, HIDDEN), 0.0)
    aq = layer_norm(hq + ff, aux_ref[3:4, 0:HIDDEN], aux_ref[4:5, 0:HIDDEN])

    # ---------------- GRUCell, single fused (8,64)x(64,128) gate dot ----------------
    gru_in = jnp.concatenate([aq, h_prev], axis=-1)          # (BA_PAD, 2H)
    g = bdot(gru_in, w_ref[:, SEG_GRU:SEG_GRU + 4 * HIDDEN]) + bseg(SEG_GRU, 4 * HIDDEN)
    r = jax.nn.sigmoid(g[:, 0:HIDDEN])
    z = jax.nn.sigmoid(g[:, HIDDEN:2 * HIDDEN])
    n = jnp.tanh(g[:, 2 * HIDDEN:3 * HIDDEN] + r * g[:, 3 * HIDDEN:4 * HIDDEN])
    h_new = (1.0 - z) * n + z * h_prev                       # (BA_PAD, H)
    h_sc[...] = h_new

    # ---------------- action heads (lane-dense q assembly) ----------------
    x1 = jnp.maximum(bdot(h_new, w32(SEG_N1, HIDDEN)) + bseg(SEG_N1, HIDDEN), 0.0)
    q_norm = bdot(x1, w32(SEG_N2, HIDDEN)) + bseg(SEG_N2, HIDDEN)   # (BA_PAD, 32)

    a1 = jnp.maximum(bdot(emb, w32(SEG_I1, HIDDEN)) + bseg(SEG_I1, HIDDEN), 0.0)
    a2 = (bdot(a1, w32(SEG_I2, HIDDEN)) + bseg(SEG_I2, HIDDEN))
    a2 = a2.reshape(BA_PAD, N_ENTITIES, HIDDEN)
    e_idx = jax.lax.broadcasted_iota(jnp.int32, (1, N_ENTITIES, 1), 1)
    ally_w = jnp.where((e_idx >= 1) & (e_idx < 1 + N_ALLIES), 1.0 / N_ALLIES, 0.0)
    action_key = jnp.sum(a2 * ally_w, axis=1)                # (BA_PAD, 32), lanes 9:12

    # merged lane-dense output: q in lanes 0:19 (of 0:32), h_new in lanes 32:64
    out_ref[...] = jnp.concatenate([q_norm + action_key, h_new], axis=-1)


def make_params(key):
    keys = iter(jax.random.split(key, 40))

    def lin(fan_in, fan_out, bound_fan=None):
        kw, kb = jax.random.split(next(keys))
        bound = 1.0 / ((bound_fan if bound_fan is not None else fan_in) ** 0.5)
        w = jax.random.uniform(kw, (fan_in, fan_out), jnp.float32, -bound, bound)
        b = jax.random.uniform(kb, (1, fan_out), jnp.float32, -bound, bound)
        return w, b

    w_own, b_own = lin(OWN_F, HIDDEN)
    w_ally, b_ally = lin(ALLY_F, HIDDEN)
    w_enemy, b_enemy = lin(ENEMY_F, HIDDEN)
    wq, bq = lin(HIDDEN, HIDDEN)
    wk, bk = lin(HIDDEN, HIDDEN)
    wv, bv = lin(HIDDEN, HIDDEN)
    wo, bo = lin(HIDDEN, HIDDEN)
    rff_w, rff_b = lin(HIDDEN, HIDDEN)
    # GRUCell params, bound = 1/sqrt(hidden)
    w_ir, b_ir = lin(HIDDEN, HIDDEN, HIDDEN)
    w_iz, b_iz = lin(HIDDEN, HIDDEN, HIDDEN)
    w_in_, b_in_ = lin(HIDDEN, HIDDEN, HIDDEN)
    w_hr, b_hr = lin(HIDDEN, HIDDEN, HIDDEN)
    w_hz, b_hz = lin(HIDDEN, HIDDEN, HIDDEN)
    w_hn, b_hn = lin(HIDDEN, HIDDEN, HIDDEN)
    nw1, nb1 = lin(HIDDEN, HIDDEN)
    nw2, nb2 = lin(HIDDEN, N_ACTIONS - 3)
    iw1, ib1 = lin(HIDDEN, HIDDEN)
    iw2, ib2 = lin(HIDDEN, 3)

    w = jnp.zeros((W_ROWS, WCOLS), jnp.float32)
    aux = jnp.zeros((AUX_ROWS, WCOLS), jnp.float32)

    # ---- embedding: block-diagonal weight, per-type biases folded via one-hot rows
    w = w.at[0:OWN_F, SEG_EMB:SEG_EMB + HIDDEN].set(w_own)
    w = w.at[OWN_F:OWN_F + ALLY_F, SEG_EMB:SEG_EMB + HIDDEN].set(w_ally)
    w = w.at[OWN_F + ALLY_F:F_TOT, SEG_EMB:SEG_EMB + HIDDEN].set(w_enemy)
    w = w.at[F_TOT + 0, SEG_EMB:SEG_EMB + HIDDEN].set(b_own[0])
    w = w.at[F_TOT + 1, SEG_EMB:SEG_EMB + HIDDEN].set(b_ally[0])
    w = w.at[F_TOT + 2, SEG_EMB:SEG_EMB + HIDDEN].set(b_enemy[0])

    def put(w_, aux_, off, wmat, bvec):
        w_ = w_.at[0:wmat.shape[0], off:off + wmat.shape[1]].set(wmat)
        aux_ = aux_.at[0:1, off:off + bvec.shape[1]].set(bvec)
        return w_, aux_

    w, aux = put(w, aux, SEG_QKV, jnp.concatenate([wq, wk, wv], axis=1),
                 jnp.concatenate([bq, bk, bv], axis=1))
    w, aux = put(w, aux, SEG_WO, wo, bo)
    w, aux = put(w, aux, SEG_RFF, rff_w, rff_b)

    # ---- head selector (0/1): seg (H, n_head) in W; segT (n_head, H) in AUX rows 1:5
    seg = (jnp.arange(HIDDEN)[:, None] // HEAD_DIM
           == jnp.arange(N_HEAD)[None, :]).astype(jnp.float32)
    w = w.at[0:HIDDEN, SEG_HSEL:SEG_HSEL + N_HEAD].set(seg)
    aux = aux.at[1:1 + N_HEAD, SEG_HSEL:SEG_HSEL + HIDDEN].set(seg.T)

    # ---- fused GRU block (2H, 4H): columns [r | z | gi_n | gh_n]
    w_gru = jnp.zeros((2 * HIDDEN, 4 * HIDDEN), jnp.float32)
    w_gru = w_gru.at[0:HIDDEN, 0:HIDDEN].set(w_ir).at[HIDDEN:, 0:HIDDEN].set(w_hr)
    w_gru = w_gru.at[0:HIDDEN, HIDDEN:2 * HIDDEN].set(w_iz).at[HIDDEN:, HIDDEN:2 * HIDDEN].set(w_hz)
    w_gru = w_gru.at[0:HIDDEN, 2 * HIDDEN:3 * HIDDEN].set(w_in_)
    w_gru = w_gru.at[HIDDEN:, 3 * HIDDEN:4 * HIDDEN].set(w_hn)
    b_gru = jnp.concatenate([b_ir + b_hr, b_iz + b_hz, b_in_, b_hn], axis=1)
    w, aux = put(w, aux, SEG_GRU, w_gru, b_gru)

    w, aux = put(w, aux, SEG_N1, nw1, nb1)

    # ---- scatter last-layer columns into the 19-wide q layout (lane-dense output)
    nw2p = jnp.zeros((HIDDEN, HIDDEN), jnp.float32)
    nw2p = nw2p.at[:, 0:9].set(nw2[:, 0:9]).at[:, 12:N_ACTIONS].set(nw2[:, 9:])
    nb2p = jnp.zeros((1, HIDDEN), jnp.float32)
    nb2p = nb2p.at[:, 0:9].set(nb2[:, 0:9]).at[:, 12:N_ACTIONS].set(nb2[:, 9:])
    w, aux = put(w, aux, SEG_N2, nw2p, nb2p)

    w, aux = put(w, aux, SEG_I1, iw1, ib1)
    iw2p = jnp.zeros((HIDDEN, HIDDEN), jnp.float32).at[:, 9:12].set(iw2)
    ib2p = jnp.zeros((1, HIDDEN), jnp.float32).at[:, 9:12].set(ib2)
    w, aux = put(w, aux, SEG_I2, iw2p, ib2p)

    # ---- LayerNorm params (PyTorch defaults: gamma=1, beta=0) in AUX rows 1..4, cols 0:32
    aux = aux.at[1, 0:HIDDEN].set(1.0)
    aux = aux.at[3, 0:HIDDEN].set(1.0)

    return dict(w=w.astype(jnp.bfloat16), aux=aux)


def pack_entities_seq(own, ally, enemy):
    """(T, BA, n, f) x3 -> (T, BA_PAD*E, 64) bf16 block-diagonal entity tensor."""
    def blk(x, lo, hot):
        t, b, n, f = x.shape
        out = jnp.zeros((t, b, n, F_PAD64), jnp.float32)
        out = out.at[..., lo:lo + f].set(x)
        out = out.at[..., F_TOT + hot].set(1.0)     # type one-hot lane -> folded bias
        return out

    ent = jnp.concatenate([blk(own, 0, 0),
                           blk(ally, OWN_F, 1),
                           blk(enemy, OWN_F + ALLY_F, 2)], axis=2)   # (T, BA, E, 64)
    ent = jnp.pad(ent, ((0, 0), (0, BA_PAD - BA), (0, 0), (0, 0)))
    return ent.reshape(own.shape[0], ROWS_E, F_PAD64).astype(jnp.bfloat16)


@jax.jit
def spectra_forward_seq(own, ally, enemy, hidden, params):
    """Rollout over T timesteps in one pallas_call (weights stay VMEM-resident)."""
    T = own.shape[0]
    ent = pack_entities_seq(own, ally, enemy)
    hid = jnp.pad(hidden.reshape(BA, HIDDEN), ((0, BA_PAD - BA), (0, 0)))

    cost = pl.CostEstimate(
        flops=int(T * _FLOPS_PER_STEP),
        transcendentals=int(T * _TRANS_PER_STEP),
        bytes_accessed=int(T * (ROWS_E * F_PAD64 * 2 + BA_PAD * 2 * HIDDEN * 4)
                           + W_ROWS * WCOLS * 2 + AUX_ROWS * WCOLS * 4
                           + BA_PAD * HIDDEN * 4),
    )

    out = pl.pallas_call(
        spectra_kernel,
        out_shape=jax.ShapeDtypeStruct((T, BA_PAD, 2 * HIDDEN), jnp.float32),
        grid_spec=pltpu.PrefetchScalarGridSpec(
            num_scalar_prefetch=0,
            grid=(T,),
            in_specs=[
                pl.BlockSpec((None, ROWS_E, F_PAD64), lambda t: (t, 0, 0)),
                pl.BlockSpec((BA_PAD, HIDDEN), lambda t: (0, 0)),
                pl.BlockSpec((W_ROWS, WCOLS), lambda t: (0, 0)),
                pl.BlockSpec((AUX_ROWS, WCOLS), lambda t: (0, 0)),
            ],
            out_specs=pl.BlockSpec((None, BA_PAD, 2 * HIDDEN), lambda t: (t, 0, 0)),
            scratch_shapes=[pltpu.VMEM((BA_PAD, HIDDEN), jnp.float32)],
        ),
        compiler_params=pltpu.CompilerParams(dimension_semantics=("arbitrary",)),
        cost_estimate=cost,
    )(ent, hid, params["w"], params["aux"])

    q_seq = out[:, :BA, 0:N_ACTIONS].reshape(T, BA, 1, N_ACTIONS)
    h_seq = out[:, :BA, HIDDEN:2 * HIDDEN].reshape(T, BS, N_AGENTS, HIDDEN)
    return q_seq, h_seq


def spectra_forward(own, ally, enemy, hidden, params):
    """Single-step forward matching the reference module's signature/shapes."""
    q_seq, h_seq = spectra_forward_seq(own[None], ally[None], enemy[None], hidden, params)
    return q_seq[0], h_seq[0]


if __name__ == "__main__":
    key = jax.random.PRNGKey(0)
    k_in, k_p = jax.random.split(key)
    k1, k2, k3, k4 = jax.random.split(k_in, 4)
    T = 8
    own = jax.random.normal(k1, (T, BA, 1, OWN_F), jnp.float32)
    ally = jax.random.normal(k2, (T, BA, N_ALLIES, ALLY_F), jnp.float32)
    enemy = jax.random.normal(k3, (T, BA, N_ENEMIES, ENEMY_F), jnp.float32)
    enemy = enemy.at[:, 1, 2, :].set(0.0)     # one dead enemy -> exercises masking
    hidden = jax.random.normal(k4, (BS, N_AGENTS, HIDDEN), jnp.float32)

    params = make_params(k_p)

    # single-step call (reference semantics)
    q1, h1 = spectra_forward(own[0], ally[0], enemy[0], hidden, params)
    # amortized T-step rollout in one pallas_call
    q_seq, h_seq = spectra_forward_seq(own, ally, enemy, hidden, params)
    jax.block_until_ready((q1, h1, q_seq, h_seq))

    assert q1.shape == (BA, 1, N_ACTIONS), q1.shape
    assert h1.shape == (BS, N_AGENTS, HIDDEN), h1.shape
    assert q_seq.shape == (T, BA, 1, N_ACTIONS), q_seq.shape
    assert h_seq.shape == (T, BS, N_AGENTS, HIDDEN), h_seq.shape
    assert bool(jnp.isfinite(q1).all()) and bool(jnp.isfinite(h1).all())
    assert bool(jnp.isfinite(q_seq).all()) and bool(jnp.isfinite(h_seq).all())
    print("KERNEL_OK")
</pallas_src>

<mosaic_0001>
module attributes {stable_mosaic.version = 11 : i64} {
  func.func @spectra_kernel(%arg0: i32, %arg1: memref<1x64x64xbf16, #tpu.memory_space<vmem>>, %arg2: memref<8x32xf32, #tpu.memory_space<vmem>>, %arg3: memref<64x1280xbf16, #tpu.memory_space<vmem>>, %arg4: memref<8x1280xf32, #tpu.memory_space<vmem>>, %arg5: memref<1x8x64xf32, #tpu.memory_space<vmem>>, %arg6: memref<8x32xf32, #tpu.memory_space<vmem>>) attributes {dimension_semantics = [#tpu.dimension_semantics<arbitrary>], iteration_bounds = array<i64: 1>, scalar_prefetch = 0 : i64, scratch_operands = 1 : i64, tpu.core_type = #tpu.core_type<tc>, window_params = [{transform_indices = @transform_0, window_bounds = array<i64: 1, 64, 64>}, {pipeline_mode = #tpu.pipeline_mode<synchronous>, transform_indices = @transform_1, window_bounds = array<i64: 8, 32>}, {pipeline_mode = #tpu.pipeline_mode<synchronous>, transform_indices = @transform_2, window_bounds = array<i64: 64, 1280>}, {pipeline_mode = #tpu.pipeline_mode<synchronous>, transform_indices = @transform_3, window_bounds = array<i64: 8, 1280>}, {transform_indices = @transform_4, window_bounds = array<i64: 1, 8, 64>}]} {
    %c0_i32 = arith.constant 0 : i32
    %0 = arith.cmpi eq, %arg0, %c0_i32 : i32
    %1 = arith.extui %0 : i1 to i32
    %c0_i32_0 = arith.constant 0 : i32
    %2 = arith.cmpi ne, %1, %c0_i32_0 : i32
    scf.if %2 {
      %c0_79 = arith.constant 0 : index
      %c0_80 = arith.constant 0 : index
      %200 = vector.load %arg2[%c0_79, %c0_80] : memref<8x32xf32, #tpu.memory_space<vmem>>, vector<8x32xf32>
      %c0_81 = arith.constant 0 : index
      %c0_82 = arith.constant 0 : index
      %201 = vector.load %arg6[%c0_81, %c0_82] : memref<8x32xf32, #tpu.memory_space<vmem>>, vector<8x32xf32>
      tpu.vector_store %arg6[%c0_81, %c0_82], %200 {strides = array<i32>} : memref<8x32xf32, #tpu.memory_space<vmem>>, vector<8x32xf32>,
    } else {
    }
    %c0 = arith.constant 0 : index
    %c0_1 = arith.constant 0 : index
    %c0_2 = arith.constant 0 : index
    %3 = vector.load %arg1[%c0, %c0_1, %c0_2] : memref<1x64x64xbf16, #tpu.memory_space<vmem>>, vector<1x64x64xbf16>
    %4 = vector.shape_cast %3 : vector<1x64x64xbf16> to vector<64x64xbf16>
    %c0_3 = arith.constant 0 : index
    %c0_4 = arith.constant 0 : index
    %5 = vector.load %arg6[%c0_3, %c0_4] : memref<8x32xf32, #tpu.memory_space<vmem>>, vector<8x32xf32>
    %6 = vector.extract_strided_slice %4 {offsets = [0, 0], sizes = [64, 36], strides = [1, 1]} : vector<64x64xbf16> to vector<64x36xbf16>
    %7 = arith.extf %6 : vector<64x36xbf16> to vector<64x36xf32>
    %8 = math.absf %7 : vector<64x36xf32>
    %cst = arith.constant dense<0xFF800000> : vector<64xf32>
    %9 = vector.multi_reduction <maximumf>, %8, %cst [1] : vector<64x36xf32> to vector<64xf32>
    %10 = vector.shape_cast %9 : vector<64xf32> to vector<64x1xf32>
    %cst_5 = arith.constant 0.000000e+00 : f32
    %11 = vector.broadcast %cst_5 : f32 to vector<64x1xf32>
    %12 = arith.cmpf ogt, %10, %11 : vector<64x1xf32>
    %13 = vector.shape_cast %12 : vector<64x1xi1> to vector<8x8x1xi1>
    %c0_6 = arith.constant 0 : index
    %c0_7 = arith.constant 0 : index
    %14 = vector.load %arg3[%c0_6, %c0_7] : memref<64x1280xbf16, #tpu.memory_space<vmem>>, vector<64x32xbf16>
    %cst_8 = arith.constant dense<0.000000e+00> : vector<64x32xf32>
    %15 = tpu.matmul %4, %14, %cst_8 {dimension_numbers = #tpu.dot_dimension_numbers<[1], [0], [0], [1], [0, 0, 1, 1], [], []>} : vector<64x64xbf16>, vector<64x32xbf16>, vector<64x32xf32> -> vector<64x32xf32>
    %16 = vector.shape_cast %15 : vector<64x32xf32> to vector<8x8x32xf32>
    %17 = vector.extract_strided_slice %16 {offsets = [0, 0, 0], sizes = [8, 1, 32], strides = [1, 1, 1]} : vector<8x8x32xf32> to vector<8x1x32xf32>
    %18 = vector.shape_cast %17 : vector<8x1x32xf32> to vector<8x32xf32>
    %c0_9 = arith.constant 0 : index
    %c128 = arith.constant 128 : index
    %19 = vector.load %arg3[%c0_9, %c128] : memref<64x1280xbf16, #tpu.memory_space<vmem>>, vector<32x96xbf16>
    %20 = arith.truncf %15 : vector<64x32xf32> to vector<64x32xbf16>
    %cst_10 = arith.constant dense<0.000000e+00> : vector<64x96xf32>
    %21 = tpu.matmul %20, %19, %cst_10 {dimension_numbers = #tpu.dot_dimension_numbers<[1], [0], [0], [1], [0, 0, 1, 1], [], []>} : vector<64x32xbf16>, vector<32x96xbf16>, vector<64x96xf32> -> vector<64x96xf32>
    %c0_11 = arith.constant 0 : index
    %c128_12 = arith.constant 128 : index
    %22 = vector.load %arg4[%c0_11, %c128_12] : memref<8x1280xf32, #tpu.memory_space<vmem>>, vector<1x96xf32>
    %23 = vector.broadcast %22 : vector<1x96xf32> to vector<64x96xf32>
    %24 = arith.addf %21, %23 : vector<64x96xf32>
    %25 = vector.shape_cast %24 : vector<64x96xf32> to vector<8x8x96xf32>
    %26 = vector.extract_strided_slice %25 {offsets = [0, 0, 0], sizes = [8, 1, 32], strides = [1, 1, 1]} : vector<8x8x96xf32> to vector<8x1x32xf32>
    %27 = vector.shape_cast %26 : vector<8x1x32xf32> to vector<8x32xf32>
    %28 = vector.extract_strided_slice %25 {offsets = [0, 0, 32], sizes = [8, 8, 32], strides = [1, 1, 1]} : vector<8x8x96xf32> to vector<8x8x32xf32>
    %29 = vector.extract_strided_slice %25 {offsets = [0, 0, 64], sizes = [8, 8, 32], strides = [1, 1, 1]} : vector<8x8x96xf32> to vector<8x8x32xf32>
    %30 = vector.shape_cast %27 : vector<8x32xf32> to vector<8x1x32xf32>
    %31 = vector.broadcast %30 : vector<8x1x32xf32> to vector<8x8x32xf32>
    %32 = arith.mulf %31, %28 : vector<8x8x32xf32>
    %33 = vector.shape_cast %32 : vector<8x8x32xf32> to vector<64x32xf32>
    %c0_13 = arith.constant 0 : index
    %c512 = arith.constant 512 : index
    %34 = vector.load %arg3[%c0_13, %c512] : memref<64x1280xbf16, #tpu.memory_space<vmem>>, vector<32x4xbf16>
    %35 = arith.truncf %33 : vector<64x32xf32> to vector<64x32xbf16>
    %cst_14 = arith.constant dense<0.000000e+00> : vector<64x4xf32>
    %36 = tpu.matmul %35, %34, %cst_14 {dimension_numbers = #tpu.dot_dimension_numbers<[1], [0], [0], [1], [0, 0, 1, 1], [], []>} : vector<64x32xbf16>, vector<32x4xbf16>, vector<64x4xf32> -> vector<64x4xf32>
    %cst_15 = arith.constant 0.353553385 : f32
    %37 = vector.broadcast %cst_15 : f32 to vector<64x4xf32>
    %38 = arith.mulf %36, %37 : vector<64x4xf32>
    %39 = vector.shape_cast %38 : vector<64x4xf32> to vector<8x8x4xf32>
    %cst_16 = arith.constant -1.000000e+30 : f32
    %40 = vector.shape_cast %13 : vector<8x8x1xi1> to vector<8x8x1xi1>
    %41 = vector.broadcast %40 : vector<8x8x1xi1> to vector<8x8x4xi1>
    %42 = vector.broadcast %cst_16 : f32 to vector<8x8x4xf32>
    %43 = arith.select %41, %39, %42 : vector<8x8x4xi1>, vector<8x8x4xf32>
    %cst_17 = arith.constant dense<0xFF800000> : vector<8x4xf32>
    %44 = vector.multi_reduction <maximumf>, %43, %cst_17 [1] : vector<8x8x4xf32> to vector<8x4xf32>
    %45 = vector.shape_cast %44 : vector<8x4xf32> to vector<8x1x4xf32>
    %46 = vector.broadcast %45 : vector<8x1x4xf32> to vector<8x8x4xf32>
    %47 = arith.subf %43, %46 : vector<8x8x4xf32>
    %48 = math.exp %47 : vector<8x8x4xf32>
    %cst_18 = arith.constant dense<0.000000e+00> : vector<8x4xf32>
    %49 = vector.multi_reduction <add>, %48, %cst_18 [1] : vector<8x8x4xf32> to vector<8x4xf32>
    %50 = vector.shape_cast %49 : vector<8x4xf32> to vector<8x1x4xf32>
    %51 = tpu.reciprocal %50 {approx = true} : vector<8x1x4xf32> -> vector<8x1x4xf32>
    %52 = vector.broadcast %51 : vector<8x1x4xf32> to vector<8x8x4xf32>
    %53 = arith.mulf %48, %52 : vector<8x8x4xf32>
    %c1 = arith.constant 1 : index
    %c512_19 = arith.constant 512 : index
    %54 = vector.load %arg4[%c1, %c512_19] : memref<8x1280xf32, #tpu.memory_space<vmem>>, vector<4x32xf32>
    %55 = vector.shape_cast %53 : vector<8x8x4xf32> to vector<64x4xf32>
    %cst_20 = arith.constant dense<0.000000e+00> : vector<64x32xf32>
    %56 = tpu.matmul %55, %54, %cst_20 {dimension_numbers = #tpu.dot_dimension_numbers<[1], [0], [0], [1], [0, 0, 1, 1], [], []>} : vector<64x4xf32>, vector<4x32xf32>, vector<64x32xf32> -> vector<64x32xf32>
    %57 = vector.shape_cast %56 : vector<64x32xf32> to vector<8x8x32xf32>
    %58 = arith.mulf %57, %29 : vector<8x8x32xf32>
    %cst_21 = arith.constant dense<0.000000e+00> : vector<8x32xf32>
    %59 = vector.multi_reduction <add>, %58, %cst_21 [1] : vector<8x8x32xf32> to vector<8x32xf32>
    %c0_22 = arith.constant 0 : index
    %c256 = arith.constant 256 : index
    %60 = vector.load %arg3[%c0_22, %c256] : memref<64x1280xbf16, #tpu.memory_space<vmem>>, vector<32x32xbf16>
    %61 = arith.truncf %59 : vector<8x32xf32> to vector<8x32xbf16>
    %cst_23 = arith.constant dense<0.000000e+00> : vector<8x32xf32>
    %62 = tpu.matmul %61, %60, %cst_23 {dimension_numbers = #tpu.dot_dimension_numbers<[1], [0], [0], [1], [0, 0, 1, 1], [], []>} : vector<8x32xbf16>, vector<32x32xbf16>, vector<8x32xf32> -> vector<8x32xf32>
    %c0_24 = arith.constant 0 : index
    %c256_25 = arith.constant 256 : index
    %63 = vector.load %arg4[%c0_24, %c256_25] : memref<8x1280xf32, #tpu.memory_space<vmem>>, vector<1x32xf32>
    %64 = vector.broadcast %63 : vector<1x32xf32> to vector<8x32xf32>
    %65 = arith.addf %62, %64 : vector<8x32xf32>
    %66 = arith.addf %18, %65 : vector<8x32xf32>
    %c1_26 = arith.constant 1 : index
    %c0_27 = arith.constant 0 : index
    %67 = vector.load %arg4[%c1_26, %c0_27] : memref<8x1280xf32, #tpu.memory_space<vmem>>, vector<1x32xf32>
    %c2 = arith.constant 2 : index
    %c0_28 = arith.constant 0 : index
    %68 = vector.load %arg4[%c2, %c0_28] : memref<8x1280xf32, #tpu.memory_space<vmem>>, vector<1x32xf32>
    %cst_29 = arith.constant dense<0.000000e+00> : vector<8xf32>
    %69 = vector.multi_reduction <add>, %66, %cst_29 [1] : vector<8x32xf32> to vector<8xf32>
    %70 = vector.shape_cast %69 : vector<8xf32> to vector<8x1xf32>
    %cst_30 = arith.constant 3.200000e+01 : f32
    %71 = vector.broadcast %cst_30 : f32 to vector<8x1xf32>
    %72 = arith.divf %70, %71 : vector<8x1xf32>
    %73 = vector.broadcast %72 : vector<8x1xf32> to vector<8x32xf32>
    %74 = arith.subf %66, %73 : vector<8x32xf32>
    %75 = arith.mulf %74, %74 : vector<8x32xf32>
    %cst_31 = arith.constant dense<0.000000e+00> : vector<8xf32>
    %76 = vector.multi_reduction <add>, %75, %cst_31 [1] : vector<8x32xf32> to vector<8xf32>
    %77 = vector.shape_cast %76 : vector<8xf32> to vector<8x1xf32>
    %cst_32 = arith.constant 3.200000e+01 : f32
    %78 = vector.broadcast %cst_32 : f32 to vector<8x1xf32>
    %79 = arith.divf %77, %78 : vector<8x1xf32>
    %80 = vector.broadcast %72 : vector<8x1xf32> to vector<8x32xf32>
    %81 = arith.subf %66, %80 : vector<8x32xf32>
    %cst_33 = arith.constant 9.99999974E-6 : f32
    %82 = vector.broadcast %cst_33 : f32 to vector<8x1xf32>
    %83 = arith.addf %79, %82 : vector<8x1xf32>
    %84 = math.rsqrt %83 : vector<8x1xf32>
    %85 = vector.broadcast %84 : vector<8x1xf32> to vector<8x32xf32>
    %86 = arith.mulf %81, %85 : vector<8x32xf32>
    %87 = vector.broadcast %67 : vector<1x32xf32> to vector<8x32xf32>
    %88 = arith.mulf %86, %87 : vector<8x32xf32>
    %89 = vector.broadcast %68 : vector<1x32xf32> to vector<8x32xf32>
    %90 = arith.addf %88, %89 : vector<8x32xf32>
    %c0_34 = arith.constant 0 : index
    %c384 = arith.constant 384 : index
    %91 = vector.load %arg3[%c0_34, %c384] : memref<64x1280xbf16, #tpu.memory_space<vmem>>, vector<32x32xbf16>
    %92 = arith.truncf %90 : vector<8x32xf32> to vector<8x32xbf16>
    %cst_35 = arith.constant dense<0.000000e+00> : vector<8x32xf32>
    %93 = tpu.matmul %92, %91, %cst_35 {dimension_numbers = #tpu.dot_dimension_numbers<[1], [0], [0], [1], [0, 0, 1, 1], [], []>} : vector<8x32xbf16>, vector<32x32xbf16>, vector<8x32xf32> -> vector<8x32xf32>
    %c0_36 = arith.constant 0 : index
    %c384_37 = arith.constant 384 : index
    %94 = vector.load %arg4[%c0_36, %c384_37] : memref<8x1280xf32, #tpu.memory_space<vmem>>, vector<1x32xf32>
    %95 = vector.broadcast %94 : vector<1x32xf32> to vector<8x32xf32>
    %96 = arith.addf %93, %95 : vector<8x32xf32>
    %cst_38 = arith.constant 0.000000e+00 : f32
    %97 = vector.broadcast %cst_38 : f32 to vector<8x32xf32>
    %98 = arith.maximumf %96, %97 : vector<8x32xf32>
    %99 = arith.addf %90, %98 : vector<8x32xf32>
    %c3 = arith.constant 3 : index
    %c0_39 = arith.constant 0 : index
    %100 = vector.load %arg4[%c3, %c0_39] : memref<8x1280xf32, #tpu.memory_space<vmem>>, vector<1x32xf32>
    %c4 = arith.constant 4 : index
    %c0_40 = arith.constant 0 : index
    %101 = vector.load %arg4[%c4, %c0_40] : memref<8x1280xf32, #tpu.memory_space<vmem>>, vector<1x32xf32>
    %cst_41 = arith.constant dense<0.000000e+00> : vector<8xf32>
    %102 = vector.multi_reduction <add>, %99, %cst_41 [1] : vector<8x32xf32> to vector<8xf32>
    %103 = vector.shape_cast %102 : vector<8xf32> to vector<8x1xf32>
    %cst_42 = arith.constant 3.200000e+01 : f32
    %104 = vector.broadcast %cst_42 : f32 to vector<8x1xf32>
    %105 = arith.divf %103, %104 : vector<8x1xf32>
    %106 = vector.broadcast %105 : vector<8x1xf32> to vector<8x32xf32>
    %107 = arith.subf %99, %106 : vector<8x32xf32>
    %108 = arith.mulf %107, %107 : vector<8x32xf32>
    %cst_43 = arith.constant dense<0.000000e+00> : vector<8xf32>
    %109 = vector.multi_reduction <add>, %108, %cst_43 [1] : vector<8x32xf32> to vector<8xf32>
    %110 = vector.shape_cast %109 : vector<8xf32> to vector<8x1xf32>
    %cst_44 = arith.constant 3.200000e+01 : f32
    %111 = vector.broadcast %cst_44 : f32 to vector<8x1xf32>
    %112 = arith.divf %110, %111 : vector<8x1xf32>
    %113 = vector.broadcast %105 : vector<8x1xf32> to vector<8x32xf32>
    %114 = arith.subf %99, %113 : vector<8x32xf32>
    %cst_45 = arith.constant 9.99999974E-6 : f32
    %115 = vector.broadcast %cst_45 : f32 to vector<8x1xf32>
    %116 = arith.addf %112, %115 : vector<8x1xf32>
    %117 = math.rsqrt %116 : vector<8x1xf32>
    %118 = vector.broadcast %117 : vector<8x1xf32> to vector<8x32xf32>
    %119 = arith.mulf %114, %118 : vector<8x32xf32>
    %120 = vector.broadcast %100 : vector<1x32xf32> to vector<8x32xf32>
    %121 = arith.mulf %119, %120 : vector<8x32xf32>
    %122 = vector.broadcast %101 : vector<1x32xf32> to vector<8x32xf32>
    %123 = arith.addf %121, %122 : vector<8x32xf32>
    %124 = tpu.concatenate %123, %5 in 1 : vector<8x32xf32>, vector<8x32xf32> -> vector<8x64xf32>
    %c0_46 = arith.constant 0 : index
    %c640 = arith.constant 640 : index
    %125 = vector.load %arg3[%c0_46, %c640] : memref<64x1280xbf16, #tpu.memory_space<vmem>>, vector<64x128xbf16>
    %126 = arith.truncf %124 : vector<8x64xf32> to vector<8x64xbf16>
    %cst_47 = arith.constant dense<0.000000e+00> : vector<8x128xf32>
    %127 = tpu.matmul %126, %125, %cst_47 {dimension_numbers = #tpu.dot_dimension_numbers<[1], [0], [0], [1], [0, 0, 1, 1], [], []>} : vector<8x64xbf16>, vector<64x128xbf16>, vector<8x128xf32> -> vector<8x128xf32>
    %c0_48 = arith.constant 0 : index
    %c640_49 = arith.constant 640 : index
    %128 = vector.load %arg4[%c0_48, %c640_49] : memref<8x1280xf32, #tpu.memory_space<vmem>>, vector<1x128xf32>
    %129 = vector.broadcast %128 : vector<1x128xf32> to vector<8x128xf32>
    %130 = arith.addf %127, %129 : vector<8x128xf32>
    %131 = vector.extract_strided_slice %130 {offsets = [0, 0], sizes = [8, 32], strides = [1, 1]} : vector<8x128xf32> to vector<8x32xf32>
    %132 = arith.negf %131 : vector<8x32xf32>
    %133 = math.exp %132 : vector<8x32xf32>
    %cst_50 = arith.constant 1.000000e+00 : f32
    %134 = vector.broadcast %cst_50 : f32 to vector<8x32xf32>
    %135 = arith.addf %134, %133 : vector<8x32xf32>
    %136 = arith.divf %134, %135 : vector<8x32xf32>
    %137 = vector.extract_strided_slice %130 {offsets = [0, 32], sizes = [8, 32], strides = [1, 1]} : vector<8x128xf32> to vector<8x32xf32>
    %138 = arith.negf %137 : vector<8x32xf32>
    %139 = math.exp %138 : vector<8x32xf32>
    %cst_51 = arith.constant 1.000000e+00 : f32
    %140 = vector.broadcast %cst_51 : f32 to vector<8x32xf32>
    %141 = arith.addf %140, %139 : vector<8x32xf32>
    %142 = arith.divf %140, %141 : vector<8x32xf32>
    %143 = vector.extract_strided_slice %130 {offsets = [0, 64], sizes = [8, 32], strides = [1, 1]} : vector<8x128xf32> to vector<8x32xf32>
    %144 = vector.extract_strided_slice %130 {offsets = [0, 96], sizes = [8, 32], strides = [1, 1]} : vector<8x128xf32> to vector<8x32xf32>
    %145 = arith.mulf %136, %144 : vector<8x32xf32>
    %146 = arith.addf %143, %145 : vector<8x32xf32>
    %147 = math.tanh %146 : vector<8x32xf32>
    %cst_52 = arith.constant 1.000000e+00 : f32
    %148 = vector.broadcast %cst_52 : f32 to vector<8x32xf32>
    %149 = arith.subf %148, %142 : vector<8x32xf32>
    %150 = arith.mulf %149, %147 : vector<8x32xf32>
    %151 = arith.mulf %142, %5 : vector<8x32xf32>
    %152 = arith.addf %150, %151 : vector<8x32xf32>
    %c0_53 = arith.constant 0 : index
    %c0_54 = arith.constant 0 : index
    %153 = vector.load %arg6[%c0_53, %c0_54] : memref<8x32xf32, #tpu.memory_space<vmem>>, vector<8x32xf32>
    tpu.vector_store %arg6[%c0_53, %c0_54], %152 {strides = array<i32>} : memref<8x32xf32, #tpu.memory_space<vmem>>, vector<8x32xf32>,
    %c0_55 = arith.constant 0 : index
    %c768 = arith.constant 768 : index
    %154 = vector.load %arg3[%c0_55, %c768] : memref<64x1280xbf16, #tpu.memory_space<vmem>>, vector<32x32xbf16>
    %155 = arith.truncf %152 : vector<8x32xf32> to vector<8x32xbf16>
    %cst_56 = arith.constant dense<0.000000e+00> : vector<8x32xf32>
    %156 = tpu.matmul %155, %154, %cst_56 {dimension_numbers = #tpu.dot_dimension_numbers<[1], [0], [0], [1], [0, 0, 1, 1], [], []>} : vector<8x32xbf16>, vector<32x32xbf16>, vector<8x32xf32> -> vector<8x32xf32>
    %c0_57 = arith.constant 0 : index
    %c768_58 = arith.constant 768 : index
    %157 = vector.load %arg4[%c0_57, %c768_58] : memref<8x1280xf32, #tpu.memory_space<vmem>>, vector<1x32xf32>
    %158 = vector.broadcast %157 : vector<1x32xf32> to vector<8x32xf32>
    %159 = arith.addf %156, %158 : vector<8x32xf32>
    %cst_59 = arith.constant 0.000000e+00 : f32
    %160 = vector.broadcast %cst_59 : f32 to vector<8x32xf32>
    %161 = arith.maximumf %159, %160 : vector<8x32xf32>
    %c0_60 = arith.constant 0 : index
    %c896 = arith.constant 896 : index
    %162 = vector.load %arg3[%c0_60, %c896] : memref<64x1280xbf16, #tpu.memory_space<vmem>>, vector<32x32xbf16>
    %163 = arith.truncf %161 : vector<8x32xf32> to vector<8x32xbf16>
    %cst_61 = arith.constant dense<0.000000e+00> : vector<8x32xf32>
    %164 = tpu.matmul %163, %162, %cst_61 {dimension_numbers = #tpu.dot_dimension_numbers<[1], [0], [0], [1], [0, 0, 1, 1], [], []>} : vector<8x32xbf16>, vector<32x32xbf16>, vector<8x32xf32> -> vector<8x32xf32>
    %c0_62 = arith.constant 0 : index
    %c896_63 = arith.constant 896 : index
    %165 = vector.load %arg4[%c0_62, %c896_63] : memref<8x1280xf32, #tpu.memory_space<vmem>>, vector<1x32xf32>
    %166 = vector.broadcast %165 : vector<1x32xf32> to vector<8x32xf32>
    %167 = arith.addf %164, %166 : vector<8x32xf32>
    %c0_64 = arith.constant 0 : index
    %c1024 = arith.constant 1024 : index
    %168 = vector.load %arg3[%c0_64, %c1024] : memref<64x1280xbf16, #tpu.memory_space<vmem>>, vector<32x32xbf16>
    %169 = arith.truncf %15 : vector<64x32xf32> to vector<64x32xbf16>
    %cst_65 = arith.constant dense<0.000000e+00> : vector<64x32xf32>
    %170 = tpu.matmul %169, %168, %cst_65 {dimension_numbers = #tpu.dot_dimension_numbers<[1], [0], [0], [1], [0, 0, 1, 1], [], []>} : vector<64x32xbf16>, vector<32x32xbf16>, vector<64x32xf32> -> vector<64x32xf32>
    %c0_66 = arith.constant 0 : index
    %c1024_67 = arith.constant 1024 : index
    %171 = vector.load %arg4[%c0_66, %c1024_67] : memref<8x1280xf32, #tpu.memory_space<vmem>>, vector<1x32xf32>
    %172 = vector.broadcast %171 : vector<1x32xf32> to vector<64x32xf32>
    %173 = arith.addf %170, %172 : vector<64x32xf32>
    %cst_68 = arith.constant 0.000000e+00 : f32
    %174 = vector.broadcast %cst_68 : f32 to vector<64x32xf32>
    %175 = arith.maximumf %173, %174 : vector<64x32xf32>
    %c0_69 = arith.constant 0 : index
    %c1152 = arith.constant 1152 : index
    %176 = vector.load %arg3[%c0_69, %c1152] : memref<64x1280xbf16, #tpu.memory_space<vmem>>, vector<32x32xbf16>
    %177 = arith.truncf %175 : vector<64x32xf32> to vector<64x32xbf16>
    %cst_70 = arith.constant dense<0.000000e+00> : vector<64x32xf32>
    %178 = tpu.matmul %177, %176, %cst_70 {dimension_numbers = #tpu.dot_dimension_numbers<[1], [0], [0], [1], [0, 0, 1, 1], [], []>} : vector<64x32xbf16>, vector<32x32xbf16>, vector<64x32xf32> -> vector<64x32xf32>
    %c0_71 = arith.constant 0 : index
    %c1152_72 = arith.constant 1152 : index
    %179 = vector.load %arg4[%c0_71, %c1152_72] : memref<8x1280xf32, #tpu.memory_space<vmem>>, vector<1x32xf32>
    %180 = vector.broadcast %179 : vector<1x32xf32> to vector<64x32xf32>
    %181 = arith.addf %178, %180 : vector<64x32xf32>
    %182 = vector.shape_cast %181 : vector<64x32xf32> to vector<8x8x32xf32>
    %183 = tpu.iota {dimensions = array<i32: 1>} : vector<1x8x1xi32>
    %c1_i32 = arith.constant 1 : i32
    %184 = vector.broadcast %c1_i32 : i32 to vector<1x8x1xi32>
    %185 = arith.cmpi sge, %183, %184 : vector<1x8x1xi32>
    %c4_i32 = arith.constant 4 : i32
    %186 = vector.broadcast %c4_i32 : i32 to vector<1x8x1xi32>
    %187 = arith.cmpi slt, %183, %186 : vector<1x8x1xi32>
    %188 = arith.andi %185, %187 : vector<1x8x1xi1>
    %cst_73 = arith.constant 0.333333343 : f32
    %cst_74 = arith.constant 0.000000e+00 : f32
    %189 = vector.broadcast %cst_73 : f32 to vector<1x8x1xf32>
    %190 = vector.broadcast %cst_74 : f32 to vector<1x8x1xf32>
    %191 = arith.select %188, %189, %190 : vector<1x8x1xi1>, vector<1x8x1xf32>
    %192 = vector.broadcast %191 : vector<1x8x1xf32> to vector<8x8x32xf32>
    %193 = arith.mulf %182, %192 : vector<8x8x32xf32>
    %cst_75 = arith.constant dense<0.000000e+00> : vector<8x32xf32>
    %194 = vector.multi_reduction <add>, %193, %cst_75 [1] : vector<8x8x32xf32> to vector<8x32xf32>
    %195 = arith.addf %167, %194 : vector<8x32xf32>
    %196 = tpu.concatenate %195, %152 in 1 : vector<8x32xf32>, vector<8x32xf32> -> vector<8x64xf32>
    %c0_76 = arith.constant 0 : index
    %c0_77 = arith.constant 0 : index
    %c0_78 = arith.constant 0 : index
    %197 = vector.load %arg5[%c0_76, %c0_77, %c0_78] : memref<1x8x64xf32, #tpu.memory_space<vmem>>, vector<1x8x64xf32>
    %198 = vector.shape_cast %197 : vector<1x8x64xf32> to vector<8x64xf32>
    %199 = vector.shape_cast %196 : vector<8x64xf32> to vector<1x8x64xf32>
    tpu.vector_store %arg5[%c0_76, %c0_77, %c0_78], %199 {strides = array<i32>} : memref<1x8x64xf32, #tpu.memory_space<vmem>>, vector<1x8x64xf32>,
    return
  }
  func.func @transform_0(%arg0: i32) -> (i32, i32, i32) {
    %c0_i32 = arith.constant 0 : i32
    %c0_i32_0 = arith.constant 0 : i32
    %c0_i32_1 = arith.constant 0 : i32
    return %arg0, %c0_i32, %c0_i32_0 : i32, i32, i32
  }
  func.func @transform_1(%arg0: i32) -> (i32, i32) {
    %c0_i32 = arith.constant 0 : i32
    %c0_i32_0 = arith.constant 0 : i32
    %c0_i32_1 = arith.constant 0 : i32
    return %c0_i32, %c0_i32_0 : i32, i32
  }
  func.func @transform_2(%arg0: i32) -> (i32, i32) {
    %c0_i32 = arith.constant 0 : i32
    %c0_i32_0 = arith.constant 0 : i32
    %c0_i32_1 = arith.constant 0 : i32
    return %c0_i32, %c0_i32_0 : i32, i32
  }
  func.func @transform_3(%arg0: i32) -> (i32, i32) {
    %c0_i32 = arith.constant 0 : i32
    %c0_i32_0 = arith.constant 0 : i32
    %c0_i32_1 = arith.constant 0 : i32
    return %c0_i32, %c0_i32_0 : i32, i32
  }
  func.func @transform_4(%arg0: i32) -> (i32, i32, i32) {
    %c0_i32 = arith.constant 0 : i32
    %c0_i32_0 = arith.constant 0 : i32
    %c0_i32_1 = arith.constant 0 : i32
    return %arg0, %c0_i32, %c0_i32_0 : i32, i32, i32
  }
}

</mosaic_0001>

<llo_original>
// kernel: spectra_forward_seq.1
$region0: #{spectra_forward_seq.1}
  #allocation0 [shape = 'u32[]', space=smem, size = 0x4, offset = 0x4, fixed_abs, tag = 'smem constant byte address 0x4 - core index']
  #allocation1 [shape = 'u32[144,128]{1,0:T(1,128)}', space=vmem, size = 0x12000, scoped, tag = 'internal scratch']
  #allocation2 [shape = 'f32[8,32]{1,0:T(8,128)}', space=vmem, size = 0x1000, scoped, tag = 'scratch operand']
  %s0 = inlined_call_operand.vmem [shape: bf16[1,64,64], index: 0, kind: input, shape index: {}]
  %s1 = inlined_call_operand.vmem [shape: f32[8,32], index: 1, kind: input, shape index: {}]
  %s2 = inlined_call_operand.hbm [shape: bf16[64,1280], index: 2, kind: input, shape index: {}]
  %s3 = inlined_call_operand.vmem [shape: f32[8,1280], index: 3, kind: input, shape index: {}]
  %s4 = inlined_call_operand.vmem [shape: f32[1,8,64], index: 4, kind: output, shape index: {}]
  %s5 = sld [smem:[#allocation0]]
  $region34: #{spectra_forward_seq.1} parent=0
    _
  %s7 = ssub.s32 1, %s5
  %s8 = scalar_select 0, %s7, %s5
  $region1: #{spectra_forward_seq.1} parent=0
    #allocation3 [shape = 'u8[163840]{0}', space=vmem, size = 0x28000, scoped, tag = 'input window, operand 2, single buffered']
    #allocation4 [shape = 's32[1]{0}', space=sflag, size = 0x4, scoped, tag = 'scoped memory for spectra_forward_seq.1']
    %9 = vsyncpa [#allocation4], 0
    // Predicated region
    $region2: #{spectra_forward_seq.1} parent=1 // pred_check
      _
    $region3: #{spectra_forward_seq.1} parent=1 // pred_check_branch
      %11 = sbr.rel (0) target = $region5
    $region4: #{spectra_forward_seq.1} parent=1 // pred_region
      _
    $region5: #{spectra_forward_seq.1} parent=1 // pred_fallthru
      _
    // Predicated region
    $region6: #{spectra_forward_seq.1} parent=1 // pred_check
      _
    $region7: #{spectra_forward_seq.1} parent=1 // pred_check_branch
      %13 = sbr.rel (0) target = $region9
    $region8: #{spectra_forward_seq.1} parent=1 // pred_region
      _
    $region9: #{spectra_forward_seq.1} parent=1 // pred_fallthru
      _
    // Predicated region
    $region10: #{spectra_forward_seq.1} parent=1 // pred_check
      _
    $region11: #{spectra_forward_seq.1} parent=1 // pred_check_branch
      %15 = sbr.rel (0) target = $region13
    $region12: #{spectra_forward_seq.1} parent=1 // pred_region
      %s17 = ssub.s32 5120, 5120
      %18 = vsyncadd [#allocation4], %s17
      %s19 = sshll.u32 [#allocation3], 4
      %s20 = int_to_ptr.vmem [resolvable:$true] %s19
      %25 = dma.hbm_to_vmem [thread:$0]  %s2, 5120, %s20, [#allocation4], 640, 640, 40
    $region13: #{spectra_forward_seq.1} parent=1 // pred_fallthru
      _
    // Predicated region
    $region14: #{spectra_forward_seq.1} parent=1 // pred_check
      _
    $region15: #{spectra_forward_seq.1} parent=1 // pred_check_branch
      %27 = sbr.rel (0) target = $region17
    $region16: #{spectra_forward_seq.1} parent=1 // pred_region
      _
    $region17: #{spectra_forward_seq.1} parent=1 // pred_fallthru
      _
    // Predicated region
    $region18: #{spectra_forward_seq.1} parent=1 // pred_check
      _
    $region19: #{spectra_forward_seq.1} parent=1 // pred_check_branch
      %29 = sbr.rel (0) target = $region21
    $region20: #{spectra_forward_seq.1} parent=1 // pred_region
      %30 = dma.done [#allocation4], 5120
    $region21: #{spectra_forward_seq.1} parent=1 // pred_fallthru
      _
    %p32 = scmp.eq.s32.totalorder 0, 0
    // Predicated region
    $region22: #{spectra_forward_seq.1} parent=1 // pred_check
      %p33 = pneg %p32
    $region23: #{spectra_forward_seq.1} parent=1 // pred_check_branch
      %35 = sbr.rel (%p33) target = $region25
    $region24: #{spectra_forward_seq.1} parent=1 // pred_region
      %v36 = vld [vmem:[%s1] sm:$0xff]
      %vm37 = vcmask 261120
      %38 = vst.msk [vmem:[#allocation2] sm:$0xff] %vm37, %v36
    $region25: #{spectra_forward_seq.1} parent=1 // pred_fallthru
      _
    %v39 = vld [vmem:[%s0] sm:$0xf]
    %v40 = vld [vmem:[%s0 + $0x4] sm:$0xf]
    %v41 = vld [vmem:[%s0 + $0x8] sm:$0xf]
    %v42 = vld [vmem:[%s0 + $0xc] sm:$0xf]
    %v43 = vld [vmem:[%s0 + $0x10] sm:$0xf]
    %v44 = vld [vmem:[%s0 + $0x14] sm:$0xf]
    %v45 = vld [vmem:[%s0 + $0x18] sm:$0xf]
    %v46 = vld [vmem:[%s0 + $0x1c] sm:$0xf]
    %v47 = vld [vmem:[#allocation2] sm:$0xff]
    %v48 = vunpack.c.l.bf16 %v39
    %v49 = vunpack.c.l.bf16 %v40
    %v50 = vunpack.c.l.bf16 %v41
    %v51 = vunpack.c.l.bf16 %v42
    %v52 = vunpack.c.l.bf16 %v43
    %v53 = vunpack.c.l.bf16 %v44
    %v54 = vunpack.c.l.bf16 %v45
    %v55 = vunpack.c.l.bf16 %v46
    %v56 = vand.u32 2147483647, %v48
    %v57 = vand.u32 2147483647, %v49
    %v58 = vand.u32 2147483647, %v50
    %v59 = vand.u32 2147483647, %v51
    %v60 = vand.u32 2147483647, %v52
    %v61 = vand.u32 2147483647, %v53
    %v62 = vand.u32 2147483647, %v54
    %v63 = vand.u32 2147483647, %v55
    %vm64 = vcmask 293888
    %v65 = vsel %vm64, %v56, -inf
    %66 = vmax.xlane.f32.xlu0 %v65
    %v67 = vpop.xlane.xlu0 %66
    %v68 = vsel %vm64, %v57, -inf
    %69 = vmax.xlane.f32.xlu0 %v68
    %v70 = vpop.xlane.xlu0 %69
    %v71 = vsel %vm64, %v58, -inf
    %72 = vmax.xlane.f32.xlu0 %v71
    %v73 = vpop.xlane.xlu0 %72
    %v74 = vsel %vm64, %v59, -inf
    %75 = vmax.xlane.f32.xlu0 %v74
    %v76 = vpop.xlane.xlu0 %75
    %v77 = vsel %vm64, %v60, -inf
    %78 = vmax.xlane.f32.xlu0 %v77
    %v79 = vpop.xlane.xlu0 %78
    %v80 = vsel %vm64, %v61, -inf
    %81 = vmax.xlane.f32.xlu0 %v80
    %v82 = vpop.xlane.xlu0 %81
    %v83 = vsel %vm64, %v62, -inf
    %84 = vmax.xlane.f32.xlu0 %v83
    %v85 = vpop.xlane.xlu0 %84
    %v86 = vsel %vm64, %v63, -inf
    %87 = vmax.xlane.f32.xlu0 %v86
    %v88 = vpop.xlane.xlu0 %87
    %vm89 = vcmp.gt.f32.partialorder %v67, 0.0
    %vm90 = vcmp.gt.f32.partialorder %v70, 0.0
    %vm91 = vcmp.gt.f32.partialorder %v73, 0.0
    %vm92 = vcmp.gt.f32.partialorder %v76, 0.0
    %vm93 = vcmp.gt.f32.partialorder %v79, 0.0
    %vm94 = vcmp.gt.f32.partialorder %v82, 0.0
    %vm95 = vcmp.gt.f32.partialorder %v85, 0.0
    %vm96 = vcmp.gt.f32.partialorder %v88, 0.0
    %v97 = vld [vmem:[#allocation3] sm:$0xf]
    %v98 = vld [vmem:[#allocation3 + $0x28] sm:$0xf]
    %v99 = vld [vmem:[#allocation3 + $0x50] sm:$0xf]
    %v100 = vld [vmem:[#allocation3 + $0x78] sm:$0xf]
    %v101 = vld [vmem:[#allocation3 + $0xa0] sm:$0xf]
    %v102 = vld [vmem:[#allocation3 + $0xc8] sm:$0xf]
    %v103 = vld [vmem:[#allocation3 + $0xf0] sm:$0xf]
    %v104 = vld [vmem:[#allocation3 + $0x118] sm:$0xf]
    %v113 = vunpack.c.l.b16 %v39
    %v114 = vunpack.c.l.b16 %v40
    %v115 = vunpack.c.l.b16 %v41
    %v116 = vunpack.c.l.b16 %v42
    %v117 = vunpack.c.l.b16 %v43
    %v118 = vunpack.c.l.b16 %v44
    %v119 = vunpack.c.l.b16 %v45
    %v120 = vunpack.c.l.b16 %v46
    %v121 = vpack.c.b16 %v114, %v113
    %v122 = vpack.c.b16 %v116, %v115
    %v123 = vpack.c.b16 %v118, %v117
    %v124 = vpack.c.b16 %v120, %v119
    %v133 = vunpack.c.l.b16 %v97
    %v134 = vunpack.c.l.b16 %v98
    %v135 = vunpack.c.l.b16 %v99
    %v136 = vunpack.c.l.b16 %v100
    %v137 = vunpack.c.l.b16 %v101
    %v138 = vunpack.c.l.b16 %v102
    %v139 = vunpack.c.l.b16 %v103
    %v140 = vunpack.c.l.b16 %v104
    %v141 = vpack.c.b16 %v134, %v133
    %v142 = vpack.c.b16 %v136, %v135
    %v143 = vpack.c.b16 %v138, %v137
    %v144 = vpack.c.b16 %v140, %v139
    %vm149 = vcmask 523264
    %v151 = vsel %vm149, %v121, 0
    %v154 = vsel %vm149, %v122, 0
    %v157 = vsel %vm149, %v123, 0
    %v160 = vsel %vm149, %v124, 0
    %162 = vmatprep.subr.bf16.mxu0 0
    %163 = vmatpush1.bf16.msra.mxu0 0
    %164 = vmatprep.subr.bf16.mxu0 0
    %165 = vmatpush1.bf16.msra.mxu0 0
    %166 = vmatprep.subr.bf16.mxu0 0
    %167 = vmatpush1.bf16.msra.mxu0 0
    %168 = vmatprep.subr.bf16.mxu0 0
    %169 = vmatpush1.bf16.msra.mxu0 0
    %170 = vmatprep.subr.bf16.mxu0 0
    %171 = vmatpush1.bf16.msra.mxu0 %v144
    %172 = vmatprep.subr.bf16.mxu0 0
    %173 = vmatpush1.bf16.msra.mxu0 %v143
    %174 = vmatprep.subr.bf16.mxu0 0
    %175 = vmatpush1.bf16.msra.mxu0 %v142
    %176 = vmatprep.subr.bf16.mxu0 0
    %177 = vmatpush1.bf16.msra.mxu0 %v141
    %178 = vmatprep.subr.bf16.mxu0 0
    %179 = vmatpush2.bf16.msra.mxu0 0
    %180 = vmatprep.subr.bf16.mxu0 0
    %181 = vmatpush2.bf16.msra.mxu0 0
    %182 = vmatprep.subr.bf16.mxu0 0
    %183 = vmatpush2.bf16.msra.mxu0 0
    %184 = vmatprep.subr.bf16.mxu0 0
    %185 = vmatpush2.bf16.msra.mxu0 0
    %186 = vmatprep.subr.bf16.mxu0 0
    %187 = vmatpush2.bf16.msra.mxu0 0
    %188 = vmatprep.subr.bf16.mxu0 0
    %189 = vmatpush2.bf16.msra.mxu0 0
    %190 = vmatprep.subr.bf16.mxu0 0
    %191 = vmatpush2.bf16.msra.mxu0 0
    %192 = vmatprep.subr.bf16.mxu0 0
    %193 = vmatpush2.bf16.msra.mxu0 0
    %194 = vmatprep.mubr.bf16.mxu0 0
    %195 = vmatmul.mubr.bf16.gmra.mxu0 %v151
    %v196 = vpop.f32.mrf.mxu0
    %v197 = vadd.f32 0.0, %v196
    %v198 = vpop.f32.mrf.mxu0
    %v199 = vpop.f32.mrf.mxu0
    %v200 = vadd.f32 0.0, %v199
    %v201 = vpop.f32.mrf.mxu0
    %202 = vmatprep.mubr.bf16.mxu0 0
    %203 = vmatmul.mubr.bf16.gmra.mxu0 %v154
    %v204 = vpop.f32.mrf.mxu0
    %v205 = vadd.f32 0.0, %v204
    %v206 = vpop.f32.mrf.mxu0
    %v207 = vpop.f32.mrf.mxu0
    %v208 = vadd.f32 0.0, %v207
    %v209 = vpop.f32.mrf.mxu0
    %210 = vmatprep.mubr.bf16.mxu0 0
    %211 = vmatmul.mubr.bf16.gmra.mxu0 %v157
    %v212 = vpop.f32.mrf.mxu0
    %v213 = vadd.f32 0.0, %v212
    %v214 = vpop.f32.mrf.mxu0
    %v215 = vpop.f32.mrf.mxu0
    %v216 = vadd.f32 0.0, %v215
    %v217 = vpop.f32.mrf.mxu0
    %218 = vmatprep.mubr.bf16.mxu0 0
    %219 = vmatmul.mubr.bf16.gmra.mxu0 %v160
    %v220 = vpop.f32.mrf.mxu0
    %v221 = vadd.f32 0.0, %v220
    %v222 = vpop.f32.mrf.mxu0
    %v223 = vpop.f32.mrf.mxu0
    %v224 = vadd.f32 0.0, %v223
    %v225 = vpop.f32.mrf.mxu0
    %226 = vdwg.mxu0
    %v227 = vld [vmem:[#allocation3 + $0x4] sm:$0xf]
    %v228 = vld [vmem:[#allocation3 + $0x2c] sm:$0xf]
    %v229 = vld [vmem:[#allocation3 + $0x54] sm:$0xf]
    %v230 = vld [vmem:[#allocation3 + $0x7c] sm:$0xf]
    %v231 = vpack.c.bf16 %v200, %v197
    %v232 = vpack.c.bf16 %v208, %v205
    %v233 = vpack.c.bf16 %v216, %v213
    %v234 = vpack.c.bf16 %v224, %v221
    %v235 = vld [vmem:[%s3 + $0x8] ss:$0 sm:$0xff]
    %v240 = vunpack.c.l.b16 %v227
    %v241 = vunpack.c.l.b16 %v228
    %v242 = vunpack.c.l.b16 %v229
    %v243 = vunpack.c.l.b16 %v230
    %v244 = vpack.c.b16 %v241, %v240
    %v245 = vpack.c.b16 %v243, %v242
    %vm248 = vcmask 261120
    %v250 = vsel %vm248, %v231, 0
    %v253 = vsel %vm248, %v232, 0
    %v256 = vsel %vm248, %v233, 0
    %v259 = vsel %vm248, %v234, 0
    %261 = vmatprep.subr.bf16.mxu0 0
    %262 = vmatpush1.bf16.msra.mxu0 0
    %263 = vmatprep.subr.bf16.mxu0 0
    %264 = vmatpush1.bf16.msra.mxu0 0
    %265 = vmatprep.subr.bf16.mxu0 0
    %266 = vmatpush1.bf16.msra.mxu0 0
    %267 = vmatprep.subr.bf16.mxu0 0
    %268 = vmatpush1.bf16.msra.mxu0 0
    %269 = vmatprep.subr.bf16.mxu0 0
    %270 = vmatpush1.bf16.msra.mxu0 0
    %271 = vmatprep.subr.bf16.mxu0 0
    %272 = vmatpush1.bf16.msra.mxu0 0
    %273 = vmatprep.subr.bf16.mxu0 0
    %274 = vmatpush1.bf16.msra.mxu0 %v245
    %275 = vmatprep.subr.bf16.mxu0 0
    %276 = vmatpush1.bf16.msra.mxu0 %v244
    %277 = vmatprep.subr.bf16.mxu0 0
    %278 = vmatpush2.bf16.msra.mxu0 0
    %279 = vmatprep.subr.bf16.mxu0 0
    %280 = vmatpush2.bf16.msra.mxu0 0
    %281 = vmatprep.subr.bf16.mxu0 0
    %282 = vmatpush2.bf16.msra.mxu0 0
    %283 = vmatprep.subr.bf16.mxu0 0
    %284 = vmatpush2.bf16.msra.mxu0 0
    %285 = vmatprep.subr.bf16.mxu0 0
    %286 = vmatpush2.bf16.msra.mxu0 0
    %287 = vmatprep.subr.bf16.mxu0 0
    %288 = vmatpush2.bf16.msra.mxu0 0
    %289 = vmatprep.subr.bf16.mxu0 0
    %290 = vmatpush2.bf16.msra.mxu0 0
    %291 = vmatprep.subr.bf16.mxu0 0
    %292 = vmatpush2.bf16.msra.mxu0 0
    %293 = vmatprep.mubr.bf16.mxu0 0
    %294 = vmatmul.mubr.bf16.gmra.mxu0 %v250
    %v295 = vpop.f32.mrf.mxu0
    %v296 = vadd.f32 %v235, %v295
    %v297 = vpop.f32.mrf.mxu0
    %v298 = vpop.f32.mrf.mxu0
    %v299 = vadd.f32 %v235, %v298
    %v300 = vpop.f32.mrf.mxu0
    %301 = vmatprep.mubr.bf16.mxu0 0
    %302 = vmatmul.mubr.bf16.gmra.mxu0 %v253
    %v303 = vpop.f32.mrf.mxu0
    %v304 = vadd.f32 %v235, %v303
    %v305 = vpop.f32.mrf.mxu0
    %v306 = vpop.f32.mrf.mxu0
    %v307 = vadd.f32 %v235, %v306
    %v308 = vpop.f32.mrf.mxu0
    %309 = vmatprep.mubr.bf16.mxu0 0
    %310 = vmatmul.mubr.bf16.gmra.mxu0 %v256
    %v311 = vpop.f32.mrf.mxu0
    %v312 = vadd.f32 %v235, %v311
    %v313 = vpop.f32.mrf.mxu0
    %v314 = vpop.f32.mrf.mxu0
    %v315 = vadd.f32 %v235, %v314
    %v316 = vpop.f32.mrf.mxu0
    %317 = vmatprep.mubr.bf16.mxu0 0
    %318 = vmatmul.mubr.bf16.gmra.mxu0 %v259
    %v319 = vpop.f32.mrf.mxu0
    %v320 = vadd.f32 %v235, %v319
    %v321 = vpop.f32.mrf.mxu0
    %v322 = vpop.f32.mrf.mxu0
    %v323 = vadd.f32 %v235, %v322
    %v324 = vpop.f32.mrf.mxu0
    %325 = vdwg.mxu0
    %v326 = vlaneseq
    %v327 = vshrl.u32 %v326, 7
    %v328 = vsub.s32 0, %v327
    %v329 = vrot.slane %v296, %v328
    %v330 = vlaneseq
    %v331 = vshrl.u32 %v330, 7
    %v332 = vsub.s32 0, %v331
    %v333 = vrot.slane %v299, %v332
    %v334 = vlaneseq
    %v335 = vshrl.u32 %v334, 7
    %v336 = vsub.s32 0, %v335
    %v337 = vrot.slane %v304, %v336
    %v338 = vlaneseq
    %v339 = vshrl.u32 %v338, 7
    %v340 = vsub.s32 0, %v339
    %v341 = vrot.slane %v307, %v340
    %v342 = vlaneseq
    %v343 = vshrl.u32 %v342, 7
    %v344 = vsub.s32 0, %v343
    %v345 = vrot.slane %v312, %v344
    %v346 = vlaneseq
    %v347 = vshrl.u32 %v346, 7
    %v348 = vsub.s32 0, %v347
    %v349 = vrot.slane %v315, %v348
    %v350 = vlaneseq
    %v351 = vshrl.u32 %v350, 7
    %v352 = vsub.s32 0, %v351
    %v353 = vrot.slane %v320, %v352
    %v354 = vlaneseq
    %v355 = vshrl.u32 %v354, 7
    %v356 = vsub.s32 0, %v355
    %v357 = vrot.slane %v323, %v356
    %366 = vrot.lane.b32.xlu0 %v296, 96
    %v367 = vpop.permute.xlu0 %366
    %368 = vrot.lane.b32.xlu0 %v299, 96
    %v369 = vpop.permute.xlu0 %368
    %370 = vrot.lane.b32.xlu0 %v304, 96
    %v371 = vpop.permute.xlu0 %370
    %372 = vrot.lane.b32.xlu0 %v307, 96
    %v373 = vpop.permute.xlu0 %372
    %374 = vrot.lane.b32.xlu0 %v312, 96
    %v375 = vpop.permute.xlu0 %374
    %376 = vrot.lane.b32.xlu0 %v315, 96
    %v377 = vpop.permute.xlu0 %376
    %378 = vrot.lane.b32.xlu0 %v320, 96
    %v379 = vpop.permute.xlu0 %378
    %380 = vrot.lane.b32.xlu0 %v323, 96
    %v381 = vpop.permute.xlu0 %380
    %v390 = vmul.f32 %v329, %v367
    %v391 = vmul.f32 %v333, %v369
    %v392 = vmul.f32 %v337, %v371
    %v393 = vmul.f32 %v341, %v373
    %v394 = vmul.f32 %v345, %v375
    %v395 = vmul.f32 %v349, %v377
    %v396 = vmul.f32 %v353, %v379
    %v397 = vmul.f32 %v357, %v381
    %v398 = vld [vmem:[#allocation3 + $0x10] sm:$0xf]
    %v399 = vld [vmem:[#allocation3 + $0x38] sm:$0xf]
    %v400 = vld [vmem:[#allocation3 + $0x60] sm:$0xf]
    %v401 = vld [vmem:[#allocation3 + $0x88] sm:$0xf]
    %v402 = vpack.c.bf16 %v391, %v390
    %v403 = vpack.c.bf16 %v393, %v392
    %v404 = vpack.c.bf16 %v395, %v394
    %v405 = vpack.c.bf16 %v397, %v396
    %v410 = vunpack.c.l.b16 %v398
    %v411 = vunpack.c.l.b16 %v399
    %v412 = vunpack.c.l.b16 %v400
    %v413 = vunpack.c.l.b16 %v401
    %v414 = vpack.c.b16 %v411, %v410
    %v415 = vpack.c.b16 %v413, %v412
    %v419 = vsel %vm248, %v402, 0
    %v422 = vsel %vm248, %v403, 0
    %v425 = vsel %vm248, %v404, 0
    %v428 = vsel %vm248, %v405, 0
    %430 = vmatprep.subr.bf16.mxu0 0
    %431 = vmatpush1.bf16.msra.mxu0 0
    %432 = vmatprep.subr.bf16.mxu0 0
    %433 = vmatpush1.bf16.msra.mxu0 0
    %434 = vmatprep.subr.bf16.mxu0 0
    %435 = vmatpush1.bf16.msra.mxu0 0
    %436 = vmatprep.subr.bf16.mxu0 0
    %437 = vmatpush1.bf16.msra.mxu0 0
    %438 = vmatprep.subr.bf16.mxu0 0
    %439 = vmatpush1.bf16.msra.mxu0 0
    %440 = vmatprep.subr.bf16.mxu0 0
    %441 = vmatpush1.bf16.msra.mxu0 0
    %442 = vmatprep.subr.bf16.mxu0 0
    %443 = vmatpush1.bf16.msra.mxu0 %v415
    %444 = vmatprep.subr.bf16.mxu0 0
    %445 = vmatpush1.bf16.msra.mxu0 %v414
    %446 = vmatprep.subr.bf16.mxu0 0
    %447 = vmatpush2.bf16.msra.mxu0 0
    %448 = vmatprep.subr.bf16.mxu0 0
    %449 = vmatpush2.bf16.msra.mxu0 0
    %450 = vmatprep.subr.bf16.mxu0 0
    %451 = vmatpush2.bf16.msra.mxu0 0
    %452 = vmatprep.subr.bf16.mxu0 0
    %453 = vmatpush2.bf16.msra.mxu0 0
    %454 = vmatprep.subr.bf16.mxu0 0
    %455 = vmatpush2.bf16.msra.mxu0 0
    %456 = vmatprep.subr.bf16.mxu0 0
    %457 = vmatpush2.bf16.msra.mxu0 0
    %458 = vmatprep.subr.bf16.mxu0 0
    %459 = vmatpush2.bf16.msra.mxu0 0
    %460 = vmatprep.subr.bf16.mxu0 0
    %461 = vmatpush2.bf16.msra.mxu0 0
    %462 = vmatprep.mubr.bf16.mxu0 0
    %463 = vmatmul.mubr.bf16.gmra.mxu0 %v419
    %v464 = vpop.f32.mrf.mxu0
    %v465 = vadd.f32 0.0, %v464
    %v466 = vpop.f32.mrf.mxu0
    %v467 = vpop.f32.mrf.mxu0
    %v468 = vadd.f32 0.0, %v467
    %v469 = vpop.f32.mrf.mxu0
    %470 = vmatprep.mubr.bf16.mxu0 0
    %471 = vmatmul.mubr.bf16.gmra.mxu0 %v422
    %v472 = vpop.f32.mrf.mxu0
    %v473 = vadd.f32 0.0, %v472
    %v474 = vpop.f32.mrf.mxu0
    %v475 = vpop.f32.mrf.mxu0
    %v476 = vadd.f32 0.0, %v475
    %v477 = vpop.f32.mrf.mxu0
    %478 = vmatprep.mubr.bf16.mxu0 0
    %479 = vmatmul.mubr.bf16.gmra.mxu0 %v425
    %v480 = vpop.f32.mrf.mxu0
    %v481 = vadd.f32 0.0, %v480
    %v482 = vpop.f32.mrf.mxu0
    %v483 = vpop.f32.mrf.mxu0
    %v484 = vadd.f32 0.0, %v483
    %v485 = vpop.f32.mrf.mxu0
    %486 = vmatprep.mubr.bf16.mxu0 0
    %487 = vmatmul.mubr.bf16.gmra.mxu0 %v428
    %v488 = vpop.f32.mrf.mxu0
    %v489 = vadd.f32 0.0, %v488
    %v490 = vpop.f32.mrf.mxu0
    %v491 = vpop.f32.mrf.mxu0
    %v492 = vadd.f32 0.0, %v491
    %v493 = vpop.f32.mrf.mxu0
    %494 = vdwg.mxu0
    %v495 = vmul.f32 %v465, 0.35355338
    %v496 = vmul.f32 %v468, 0.35355338
    %v497 = vmul.f32 %v473, 0.35355338
    %v498 = vmul.f32 %v476, 0.35355338
    %v499 = vmul.f32 %v481, 0.35355338
    %v500 = vmul.f32 %v484, 0.35355338
    %v501 = vmul.f32 %v489, 0.35355338
    %v502 = vmul.f32 %v492, 0.35355338
    %v503 = vsel %vm89, 1, 0
    %v504 = vsel %vm90, 1, 0
    %v505 = vsel %vm91, 1, 0
    %v506 = vsel %vm92, 1, 0
    %v507 = vsel %vm93, 1, 0
    %v508 = vsel %vm94, 1, 0
    %v509 = vsel %vm95, 1, 0
    %v510 = vsel %vm96, 1, 0
    %vm511 = vcmp.eq.s32.totalorder %v503, 1
    %vm512 = vcmp.eq.s32.totalorder %v504, 1
    %vm513 = vcmp.eq.s32.totalorder %v505, 1
    %vm514 = vcmp.eq.s32.totalorder %v506, 1
    %vm515 = vcmp.eq.s32.totalorder %v507, 1
    %vm516 = vcmp.eq.s32.totalorder %v508, 1
    %vm517 = vcmp.eq.s32.totalorder %v509, 1
    %vm518 = vcmp.eq.s32.totalorder %v510, 1
    %v519 = vsel %vm511, %v495, -1e+30
    %v520 = vsel %vm512, %v496, -1e+30
    %v521 = vsel %vm513, %v497, -1e+30
    %v522 = vsel %vm514, %v498, -1e+30
    %v523 = vsel %vm515, %v499, -1e+30
    %v524 = vsel %vm516, %v500, -1e+30
    %v525 = vsel %vm517, %v501, -1e+30
    %v526 = vsel %vm518, %v502, -1e+30
    %vm527 = vcmask 31744
    %v528 = vsel %vm527, %v519, -inf
    %v529 = vrot.slane %v528, 4
    %v530 = vmax.f32 %v528, %v529
    %v531 = vrot.slane %v530, 2
    %v532 = vmax.f32 %v530, %v531
    %v533 = vrot.slane %v532, 1
    %v534 = vmax.f32 %v532, %v533
    %v535 = vsel %vm527, %v520, -inf
    %v536 = vrot.slane %v535, 4
    %v537 = vmax.f32 %v535, %v536
    %v538 = vrot.slane %v537, 2
    %v539 = vmax.f32 %v537, %v538
    %v540 = vrot.slane %v539, 1
    %v541 = vmax.f32 %v539, %v540
    %v542 = vsel %vm527, %v521, -inf
    %v543 = vrot.slane %v542, 4
    %v544 = vmax.f32 %v542, %v543
    %v545 = vrot.slane %v544, 2
    %v546 = vmax.f32 %v544, %v545
    %v547 = vrot.slane %v546, 1
    %v548 = vmax.f32 %v546, %v547
    %v549 = vsel %vm527, %v522, -inf
    %v550 = vrot.slane %v549, 4
    %v551 = vmax.f32 %v549, %v550
    %v552 = vrot.slane %v551, 2
    %v553 = vmax.f32 %v551, %v552
    %v554 = vrot.slane %v553, 1
    %v555 = vmax.f32 %v553, %v554
    %v556 = vsel %vm527, %v523, -inf
    %v557 = vrot.slane %v556, 4
    %v558 = vmax.f32 %v556, %v557
    %v559 = vrot.slane %v558, 2
    %v560 = vmax.f32 %v558, %v559
    %v561 = vrot.slane %v560, 1
    %v562 = vmax.f32 %v560, %v561
    %v563 = vsel %vm527, %v524, -inf
    %v564 = vrot.slane %v563, 4
    %v565 = vmax.f32 %v563, %v564
    %v566 = vrot.slane %v565, 2
    %v567 = vmax.f32 %v565, %v566
    %v568 = vrot.slane %v567, 1
    %v569 = vmax.f32 %v567, %v568
    %v570 = vsel %vm527, %v525, -inf
    %v571 = vrot.slane %v570, 4
    %v572 = vmax.f32 %v570, %v571
    %v573 = vrot.slane %v572, 2
    %v574 = vmax.f32 %v572, %v573
    %v575 = vrot.slane %v574, 1
    %v576 = vmax.f32 %v574, %v575
    %v577 = vsel %vm527, %v526, -inf
    %v578 = vrot.slane %v577, 4
    %v579 = vmax.f32 %v577, %v578
    %v580 = vrot.slane %v579, 2
    %v581 = vmax.f32 %v579, %v580
    %v582 = vrot.slane %v581, 1
    %v583 = vmax.f32 %v581, %v582
    %v584 = vsub.f32 %v519, %v534
    %v585 = vsub.f32 %v520, %v541
    %v586 = vsub.f32 %v521, %v548
    %v587 = vsub.f32 %v522, %v555
    %v588 = vsub.f32 %v523, %v562
    %v589 = vsub.f32 %v524, %v569
    %v590 = vsub.f32 %v525, %v576
    %v591 = vsub.f32 %v526, %v583
    %v592 = vmul.f32 %v584, 1.442695
    %v593 = vpow.pop %v592
    %v594 = vmul.f32 %v585, 1.442695
    %v595 = vpow.pop %v594
    %v596 = vmul.f32 %v586, 1.442695
    %v597 = vpow.pop %v596
    %v598 = vmul.f32 %v587, 1.442695
    %v599 = vpow.pop %v598
    %v600 = vmul.f32 %v588, 1.442695
    %v601 = vpow.pop %v600
    %v602 = vmul.f32 %v589, 1.442695
    %v603 = vpow.pop %v602
    %v604 = vmul.f32 %v590, 1.442695
    %v605 = vpow.pop %v604
    %v606 = vmul.f32 %v591, 1.442695
    %v607 = vpow.pop %v606
    %v608 = vsel %vm527, %v593, 0.0
    %v609 = vrot.slane %v608, 4
    %v610 = vadd.f32 %v608, %v609
    %v611 = vrot.slane %v610, 2
    %v612 = vadd.f32 %v610, %v611
    %v613 = vrot.slane %v612, 1
    %v614 = vadd.f32 %v612, %v613
    %v615 = vsel %vm527, %v595, 0.0
    %v616 = vrot.slane %v615, 4
    %v617 = vadd.f32 %v615, %v616
    %v618 = vrot.slane %v617, 2
    %v619 = vadd.f32 %v617, %v618
    %v620 = vrot.slane %v619, 1
    %v621 = vadd.f32 %v619, %v620
    %v622 = vsel %vm527, %v597, 0.0
    %v623 = vrot.slane %v622, 4
    %v624 = vadd.f32 %v622, %v623
    %v625 = vrot.slane %v624, 2
    %v626 = vadd.f32 %v624, %v625
    %v627 = vrot.slane %v626, 1
    %v628 = vadd.f32 %v626, %v627
    %v629 = vsel %vm527, %v599, 0.0
    %v630 = vrot.slane %v629, 4
    %v631 = vadd.f32 %v629, %v630
    %v632 = vrot.slane %v631, 2
    %v633 = vadd.f32 %v631, %v632
    %v634 = vrot.slane %v633, 1
    %v635 = vadd.f32 %v633, %v634
    %v636 = vsel %vm527, %v601, 0.0
    %v637 = vrot.slane %v636, 4
    %v638 = vadd.f32 %v636, %v637
    %v639 = vrot.slane %v638, 2
    %v640 = vadd.f32 %v638, %v639
    %v641 = vrot.slane %v640, 1
    %v642 = vadd.f32 %v640, %v641
    %v643 = vsel %vm527, %v603, 0.0
    %v644 = vrot.slane %v643, 4
    %v645 = vadd.f32 %v643, %v644
    %v646 = vrot.slane %v645, 2
    %v647 = vadd.f32 %v645, %v646
    %v648 = vrot.slane %v647, 1
    %v649 = vadd.f32 %v647, %v648
    %v650 = vsel %vm527, %v605, 0.0
    %v651 = vrot.slane %v650, 4
    %v652 = vadd.f32 %v650, %v651
    %v653 = vrot.slane %v652, 2
    %v654 = vadd.f32 %v652, %v653
    %v655 = vrot.slane %v654, 1
    %v656 = vadd.f32 %v654, %v655
    %v657 = vsel %vm527, %v607, 0.0
    %v658 = vrot.slane %v657, 4
    %v659 = vadd.f32 %v657, %v658
    %v660 = vrot.slane %v659, 2
    %v661 = vadd.f32 %v659, %v660
    %v662 = vrot.slane %v661, 1
    %v663 = vadd.f32 %v661, %v662
    %v664 = vrcp.pop %v614
    %v665 = vrcp.pop %v621
    %v666 = vrcp.pop %v628
    %v667 = vrcp.pop %v635
    %v668 = vrcp.pop %v642
    %v669 = vrcp.pop %v649
    %v670 = vrcp.pop %v656
    %v671 = vrcp.pop %v663
    %v672 = vmul.f32 %v593, %v664
    %v673 = vmul.f32 %v595, %v665
    %v674 = vmul.f32 %v597, %v666
    %v675 = vmul.f32 %v599, %v667
    %v676 = vmul.f32 %v601, %v668
    %v677 = vmul.f32 %v603, %v669
    %v678 = vmul.f32 %v605, %v670
    %v679 = vmul.f32 %v607, %v671
    %v680 = vld [vmem:[%s3 + $0x20] sm:$0x1e]
    %v682 = vrot.slane %v680, 1
    %v684 = vsel %vm527, %v672, 0
    %v687 = vsel %vm527, %v673, 0
    %v690 = vsel %vm527, %v674, 0
    %v693 = vsel %vm527, %v675, 0
    %v696 = vsel %vm527, %v676, 0
    %v699 = vsel %vm527, %v677, 0
    %v702 = vsel %vm527, %v678, 0
    %v705 = vsel %vm527, %v679, 0
    %vm707 = vcmask 1043456
    %v708 = vsel %vm707, %v682, 0
    %710 = vmatprep.subr.mxu0 0.0
    %711 = vmatpush1.msra.mxu0 0.0
    %712 = vmatprep.subr.mxu0 0.0
    %713 = vmatpush1.msra.mxu0 0.0
    %714 = vmatprep.subr.mxu0 0.0
    %715 = vmatpush1.msra.mxu0 0.0
    %716 = vmatprep.subr.mxu0 0.0
    %717 = vmatpush1.msra.mxu0 0.0
    %718 = vmatprep.subr.mxu0 0.0
    %719 = vmatpush1.msra.mxu0 0.0
    %720 = vmatprep.subr.mxu0 0.0
    %721 = vmatpush1.msra.mxu0 0.0
    %722 = vmatprep.subr.mxu0 0.0
    %723 = vmatpush1.msra.mxu0 0.0
    %724 = vmatprep.subr.mxu0 0.0
    %725 = vmatpush1.msra.mxu0 0.0
    %726 = vmatprep.subr.mxu0 0.0
    %727 = vmatpush1.msra.mxu0 0.0
    %728 = vmatprep.subr.mxu0 0.0
    %729 = vmatpush1.msra.mxu0 0.0
    %730 = vmatprep.subr.mxu0 0.0
    %731 = vmatpush1.msra.mxu0 0.0
    %732 = vmatprep.subr.mxu0 0.0
    %733 = vmatpush1.msra.mxu0 0.0
    %734 = vmatprep.subr.mxu0 0.0
    %735 = vmatpush1.msra.mxu0 0.0
    %736 = vmatprep.subr.mxu0 0.0
    %737 = vmatpush1.msra.mxu0 0.0
    %738 = vmatprep.subr.mxu0 0.0
    %739 = vmatpush1.msra.mxu0 0.0
    %740 = vmatprep.subr.mxu0 0.0
    %741 = vmatpush1.msra.mxu0 %v708
    %742 = vmatprep.subr.mxu0 0.0
    %743 = vmatpush2.msra.mxu0 0.0
    %744 = vmatprep.subr.mxu0 0.0
    %745 = vmatpush2.msra.mxu0 0.0
    %746 = vmatprep.subr.mxu0 0.0
    %747 = vmatpush2.msra.mxu0 0.0
    %748 = vmatprep.subr.mxu0 0.0
    %749 = vmatpush2.msra.mxu0 0.0
    %750 = vmatprep.subr.mxu0 0.0
    %751 = vmatpush2.msra.mxu0 0.0
    %752 = vmatprep.subr.mxu0 0.0
    %753 = vmatpush2.msra.mxu0 0.0
    %754 = vmatprep.subr.mxu0 0.0
    %755 = vmatpush2.msra.mxu0 0.0
    %756 = vmatprep.subr.mxu0 0.0
    %757 = vmatpush2.msra.mxu0 0.0
    %758 = vmatprep.subr.mxu0 0.0
    %759 = vmatpush2.msra.mxu0 0.0
    %760 = vmatprep.subr.mxu0 0.0
    %761 = vmatpush2.msra.mxu0 0.0
    %762 = vmatprep.subr.mxu0 0.0
    %763 = vmatpush2.msra.mxu0 0.0
    %764 = vmatprep.subr.mxu0 0.0
    %765 = vmatpush2.msra.mxu0 0.0
    %766 = vmatprep.subr.mxu0 0.0
    %767 = vmatpush2.msra.mxu0 0.0
    %768 = vmatprep.subr.mxu0 0.0
    %769 = vmatpush2.msra.mxu0 0.0
    %770 = vmatprep.subr.mxu0 0.0
    %771 = vmatpush2.msra.mxu0 0.0
    %772 = vmatprep.subr.mxu0 0.0
    %773 = vmatpush2.msra.mxu0 0.0
    %774 = vmatprep.mubr.f32.mxu0 0.0
    %775 = vmatmul.mubr.f32.gmra.mxu0 %v684
    %v776 = vpop.f32.mrf.mxu0
    %v777 = vadd.f32 0.0, %v776
    %v778 = vpop.f32.mrf.mxu0
    %779 = vmatprep.mubr.f32.mxu0 0.0
    %780 = vmatmul.mubr.f32.gmra.mxu0 %v687
    %v781 = vpop.f32.mrf.mxu0
    %v782 = vadd.f32 0.0, %v781
    %v783 = vpop.f32.mrf.mxu0
    %784 = vmatprep.mubr.f32.mxu0 0.0
    %785 = vmatmul.mubr.f32.gmra.mxu0 %v690
    %v786 = vpop.f32.mrf.mxu0
    %v787 = vadd.f32 0.0, %v786
    %v788 = vpop.f32.mrf.mxu0
    %789 = vmatprep.mubr.f32.mxu0 0.0
    %790 = vmatmul.mubr.f32.gmra.mxu0 %v693
    %v791 = vpop.f32.mrf.mxu0
    %v792 = vadd.f32 0.0, %v791
    %v793 = vpop.f32.mrf.mxu0
    %794 = vmatprep.mubr.f32.mxu0 0.0
    %795 = vmatmul.mubr.f32.gmra.mxu0 %v696
    %v796 = vpop.f32.mrf.mxu0
    %v797 = vadd.f32 0.0, %v796
    %v798 = vpop.f32.mrf.mxu0
    %799 = vmatprep.mubr.f32.mxu0 0.0
    %800 = vmatmul.mubr.f32.gmra.mxu0 %v699
    %v801 = vpop.f32.mrf.mxu0
    %v802 = vadd.f32 0.0, %v801
    %v803 = vpop.f32.mrf.mxu0
    %804 = vmatprep.mubr.f32.mxu0 0.0
    %805 = vmatmul.mubr.f32.gmra.mxu0 %v702
    %v806 = vpop.f32.mrf.mxu0
    %v807 = vadd.f32 0.0, %v806
    %v808 = vpop.f32.mrf.mxu0
    %809 = vmatprep.mubr.f32.mxu0 0.0
    %810 = vmatmul.mubr.f32.gmra.mxu0 %v705
    %v811 = vpop.f32.mrf.mxu0
    %v812 = vadd.f32 0.0, %v811
    %v813 = vpop.f32.mrf.mxu0
    %814 = vdwg.mxu0
    %815 = vrot.lane.b32.xlu0 %v296, 64
    %v816 = vpop.permute.xlu0 %815
    %817 = vrot.lane.b32.xlu0 %v299, 64
    %v818 = vpop.permute.xlu0 %817
    %819 = vrot.lane.b32.xlu0 %v304, 64
    %v820 = vpop.permute.xlu0 %819
    %821 = vrot.lane.b32.xlu0 %v307, 64
    %v822 = vpop.permute.xlu0 %821
    %823 = vrot.lane.b32.xlu0 %v312, 64
    %v824 = vpop.permute.xlu0 %823
    %825 = vrot.lane.b32.xlu0 %v315, 64
    %v826 = vpop.permute.xlu0 %825
    %827 = vrot.lane.b32.xlu0 %v320, 64
    %v828 = vpop.permute.xlu0 %827
    %829 = vrot.lane.b32.xlu0 %v323, 64
    %v830 = vpop.permute.xlu0 %829
    %v839 = vmul.f32 %v777, %v816
    %v840 = vmul.f32 %v782, %v818
    %v841 = vmul.f32 %v787, %v820
    %v842 = vmul.f32 %v792, %v822
    %v843 = vmul.f32 %v797, %v824
    %v844 = vmul.f32 %v802, %v826
    %v845 = vmul.f32 %v807, %v828
    %v846 = vmul.f32 %v812, %v830
    %v847 = vsel %vm248, %v839, 0.0
    %v848 = vrot.slane %v847, 4
    %v849 = vadd.f32 %v847, %v848
    %v850 = vrot.slane %v849, 2
    %v851 = vadd.f32 %v849, %v850
    %v852 = vrot.slane %v851, 1
    %v853 = vadd.f32 %v851, %v852
    %v854 = vsel %vm248, %v840, 0.0
    %v855 = vrot.slane %v854, 4
    %v856 = vadd.f32 %v854, %v855
    %v857 = vrot.slane %v856, 2
    %v858 = vadd.f32 %v856, %v857
    %v859 = vrot.slane %v858, 1
    %v860 = vadd.f32 %v858, %v859
    %v861 = vsel %vm248, %v841, 0.0
    %v862 = vrot.slane %v861, 4
    %v863 = vadd.f32 %v861, %v862
    %v864 = vrot.slane %v863, 2
    %v865 = vadd.f32 %v863, %v864
    %v866 = vrot.slane %v865, 1
    %v867 = vadd.f32 %v865, %v866
    %v868 = vsel %vm248, %v842, 0.0
    %v869 = vrot.slane %v868, 4
    %v870 = vadd.f32 %v868, %v869
    %v871 = vrot.slane %v870, 2
    %v872 = vadd.f32 %v870, %v871
    %v873 = vrot.slane %v872, 1
    %v874 = vadd.f32 %v872, %v873
    %v875 = vsel %vm248, %v843, 0.0
    %v876 = vrot.slane %v875, 4
    %v877 = vadd.f32 %v875, %v876
    %v878 = vrot.slane %v877, 2
    %v879 = vadd.f32 %v877, %v878
    %v880 = vrot.slane %v879, 1
    %v881 = vadd.f32 %v879, %v880
    %v882 = vsel %vm248, %v844, 0.0
    %v883 = vrot.slane %v882, 4
    %v884 = vadd.f32 %v882, %v883
    %v885 = vrot.slane %v884, 2
    %v886 = vadd.f32 %v884, %v885
    %v887 = vrot.slane %v886, 1
    %v888 = vadd.f32 %v886, %v887
    %v889 = vsel %vm248, %v845, 0.0
    %v890 = vrot.slane %v889, 4
    %v891 = vadd.f32 %v889, %v890
    %v892 = vrot.slane %v891, 2
    %v893 = vadd.f32 %v891, %v892
    %v894 = vrot.slane %v893, 1
    %v895 = vadd.f32 %v893, %v894
    %v896 = vsel %vm248, %v846, 0.0
    %v897 = vrot.slane %v896, 4
    %v898 = vadd.f32 %v896, %v897
    %v899 = vrot.slane %v898, 2
    %v900 = vadd.f32 %v898, %v899
    %v901 = vrot.slane %v900, 1
    %v902 = vadd.f32 %v900, %v901
    %v903 = vld [vmem:[#allocation3 + $0x8] sm:$0xf]
    %v904 = vld [vmem:[#allocation3 + $0x30] sm:$0xf]
    %v905 = vld [vmem:[#allocation3 + $0x58] sm:$0xf]
    %v906 = vld [vmem:[#allocation3 + $0x80] sm:$0xf]
    %v907 = vpack.c.bf16 %v853, %v853
    %v908 = vpack.c.bf16 %v860, %v860
    %v909 = vpack.c.bf16 %v867, %v867
    %v910 = vpack.c.bf16 %v874, %v874
    %v911 = vpack.c.bf16 %v881, %v881
    %v912 = vpack.c.bf16 %v888, %v888
    %v913 = vpack.c.bf16 %v895, %v895
    %v914 = vpack.c.bf16 %v902, %v902
    %v915 = vld [vmem:[%s3 + $0x10] ss:$0 sm:$0xff]
    %v924 = vunpack.c.l.b16 %v907
    %v925 = vunpack.c.l.b16 %v908
    %v926 = vunpack.c.l.b16 %v909
    %v927 = vunpack.c.l.b16 %v910
    %v928 = vunpack.c.l.b16 %v911
    %v929 = vunpack.c.l.b16 %v912
    %v930 = vunpack.c.l.b16 %v913
    %v931 = vunpack.c.l.b16 %v914
    %vm932 = vcmask 1041409
    %v933 = vsel %vm932, %v925, %v924
    %vm934 = vcmask 1042434
    %v935 = vsel %vm934, %v926, %v933
    %vm936 = vcmask 1043459
    %v937 = vsel %vm936, %v927, %v935
    %vm938 = vcmask 1044484
    %v939 = vsel %vm938, %v928, %v937
    %vm940 = vcmask 1045509
    %v941 = vsel %vm940, %v929, %v939
    %vm942 = vcmask 1046534
    %v943 = vsel %vm942, %v930, %v941
    %vm944 = vcmask 1047559
    %v945 = vsel %vm944, %v931, %v943
    %v946 = vpack.c.b16 %v945, %v945
    %v951 = vunpack.c.l.b16 %v903
    %v952 = vunpack.c.l.b16 %v904
    %v953 = vunpack.c.l.b16 %v905
    %v954 = vunpack.c.l.b16 %v906
    %v955 = vpack.c.b16 %v952, %v951
    %v956 = vpack.c.b16 %v954, %v953
    %v960 = vsel %vm248, %v946, 0
    %962 = vmatprep.subr.bf16.mxu0 0
    %963 = vmatpush1.bf16.msra.mxu0 0
    %964 = vmatprep.subr.bf16.mxu0 0
    %965 = vmatpush1.bf16.msra.mxu0 0
    %966 = vmatprep.subr.bf16.mxu0 0
    %967 = vmatpush1.bf16.msra.mxu0 0
    %968 = vmatprep.subr.bf16.mxu0 0
    %969 = vmatpush1.bf16.msra.mxu0 0
    %970 = vmatprep.subr.bf16.mxu0 0
    %971 = vmatpush1.bf16.msra.mxu0 0
    %972 = vmatprep.subr.bf16.mxu0 0
    %973 = vmatpush1.bf16.msra.mxu0 0
    %974 = vmatprep.subr.bf16.mxu0 0
    %975 = vmatpush1.bf16.msra.mxu0 %v956
    %976 = vmatprep.subr.bf16.mxu0 0
    %977 = vmatpush1.bf16.msra.mxu0 %v955
    %978 = vmatprep.subr.bf16.mxu0 0
    %979 = vmatpush2.bf16.msra.mxu0 0
    %980 = vmatprep.subr.bf16.mxu0 0
    %981 = vmatpush2.bf16.msra.mxu0 0
    %982 = vmatprep.subr.bf16.mxu0 0
    %983 = vmatpush2.bf16.msra.mxu0 0
    %984 = vmatprep.subr.bf16.mxu0 0
    %985 = vmatpush2.bf16.msra.mxu0 0
    %986 = vmatprep.subr.bf16.mxu0 0
    %987 = vmatpush2.bf16.msra.mxu0 0
    %988 = vmatprep.subr.bf16.mxu0 0
    %989 = vmatpush2.bf16.msra.mxu0 0
    %990 = vmatprep.subr.bf16.mxu0 0
    %991 = vmatpush2.bf16.msra.mxu0 0
    %992 = vmatprep.subr.bf16.mxu0 0
    %993 = vmatpush2.bf16.msra.mxu0 0
    %994 = vmatprep.mubr.bf16.mxu0 0
    %995 = vmatmul.mubr.bf16.gmra.mxu0 %v960
    %v996 = vpop.f32.mrf.mxu0
    %v997 = vadd.f32 %v915, %v996
    %v998 = vpop.f32.mrf.mxu0
    %v999 = vpop.f32.mrf.mxu0
    %v1000 = vpop.f32.mrf.mxu0
    %1001 = vdwg.mxu0
    %v1003 = vrot.slane %v997, 1
    %v1004 = vrot.slane %v997, 2
    %v1005 = vrot.slane %v997, 3
    %v1006 = vrot.slane %v997, 4
    %v1007 = vrot.slane %v997, 5
    %v1008 = vrot.slane %v997, 6
    %v1009 = vrot.slane %v997, 7
    %v1018 = vadd.f32 %v197, %v997
    %v1019 = vadd.f32 %v200, %v1003
    %v1020 = vadd.f32 %v205, %v1004
    %v1021 = vadd.f32 %v208, %v1005
    %v1022 = vadd.f32 %v213, %v1006
    %v1023 = vadd.f32 %v216, %v1007
    %v1024 = vadd.f32 %v221, %v1008
    %v1025 = vadd.f32 %v224, %v1009
    %v1026 = vld [vmem:[%s3 + $0x1] ss:$0 sm:$0xff]
    %v1027 = vld [vmem:[%s3 + $0x2] ss:$0 sm:$0xff]
    %v1036 = vrot.slane %v1019, 7
    %v1037 = vsel %vm932, %v1036, %v1018
    %v1038 = vrot.slane %v1020, 6
    %v1039 = vsel %vm934, %v1038, %v1037
    %v1040 = vrot.slane %v1021, 5
    %v1041 = vsel %vm936, %v1040, %v1039
    %v1042 = vrot.slane %v1022, 4
    %v1043 = vsel %vm938, %v1042, %v1041
    %v1044 = vrot.slane %v1023, 3
    %v1045 = vsel %vm940, %v1044, %v1043
    %v1046 = vrot.slane %v1024, 2
    %v1047 = vsel %vm942, %v1046, %v1045
    %v1048 = vrot.slane %v1025, 1
    %v1049 = vsel %vm944, %v1048, %v1047
    %v1051 = vsel %vm248, %v1049, 0.0
    %1052 = vadd.xlane.f32.xlu0 %v1051
    %v1053 = vpop.xlane.xlu0 %1052
    %v1054 = vrcp.pop 32.0
    %v1055 = vmul.f32 %v1053, %v1054
    %v1057 = vrot.slane %v1055, 1
    %v1058 = vrot.slane %v1055, 2
    %v1059 = vrot.slane %v1055, 3
    %v1060 = vrot.slane %v1055, 4
    %v1061 = vrot.slane %v1055, 5
    %v1062 = vrot.slane %v1055, 6
    %v1063 = vrot.slane %v1055, 7
    %v1072 = vsub.f32 %v1018, %v1055
    %v1073 = vsub.f32 %v1019, %v1057
    %v1074 = vsub.f32 %v1020, %v1058
    %v1075 = vsub.f32 %v1021, %v1059
    %v1076 = vsub.f32 %v1022, %v1060
    %v1077 = vsub.f32 %v1023, %v1061
    %v1078 = vsub.f32 %v1024, %v1062
    %v1079 = vsub.f32 %v1025, %v1063
    %v1080 = vmul.f32 %v1072, %v1072
    %v1081 = vmul.f32 %v1073, %v1073
    %v1082 = vmul.f32 %v1074, %v1074
    %v1083 = vmul.f32 %v1075, %v1075
    %v1084 = vmul.f32 %v1076, %v1076
    %v1085 = vmul.f32 %v1077, %v1077
    %v1086 = vmul.f32 %v1078, %v1078
    %v1087 = vmul.f32 %v1079, %v1079
    %v1096 = vrot.slane %v1081, 7
    %v1097 = vsel %vm932, %v1096, %v1080
    %v1098 = vrot.slane %v1082, 6
    %v1099 = vsel %vm934, %v1098, %v1097
    %v1100 = vrot.slane %v1083, 5
    %v1101 = vsel %vm936, %v1100, %v1099
    %v1102 = vrot.slane %v1084, 4
    %v1103 = vsel %vm938, %v1102, %v1101
    %v1104 = vrot.slane %v1085, 3
    %v1105 = vsel %vm940, %v1104, %v1103
    %v1106 = vrot.slane %v1086, 2
    %v1107 = vsel %vm942, %v1106, %v1105
    %v1108 = vrot.slane %v1087, 1
    %v1109 = vsel %vm944, %v1108, %v1107
    %v1111 = vsel %vm248, %v1109, 0.0
    %1112 = vadd.xlane.f32.xlu0 %v1111
    %v1113 = vpop.xlane.xlu0 %1112
    %v1114 = vmul.f32 %v1113, %v1054
    %v1115 = vadd.f32 %v1114, 1e-05
    %v1116 = vrsqrt.pop %v1115
    %v1118 = vrot.slane %v1116, 1
    %v1119 = vrot.slane %v1116, 2
    %v1120 = vrot.slane %v1116, 3
    %v1121 = vrot.slane %v1116, 4
    %v1122 = vrot.slane %v1116, 5
    %v1123 = vrot.slane %v1116, 6
    %v1124 = vrot.slane %v1116, 7
    %v1133 = vmul.f32 %v1072, %v1116
    %v1134 = vmul.f32 %v1073, %v1118
    %v1135 = vmul.f32 %v1074, %v1119
    %v1136 = vmul.f32 %v1075, %v1120
    %v1137 = vmul.f32 %v1076, %v1121
    %v1138 = vmul.f32 %v1077, %v1122
    %v1139 = vmul.f32 %v1078, %v1123
    %v1140 = vmul.f32 %v1079, %v1124
    %v1141 = vmul.f32 %v1133, %v1026
    %v1142 = vmul.f32 %v1134, %v1026
    %v1143 = vmul.f32 %v1135, %v1026
    %v1144 = vmul.f32 %v1136, %v1026
    %v1145 = vmul.f32 %v1137, %v1026
    %v1146 = vmul.f32 %v1138, %v1026
    %v1147 = vmul.f32 %v1139, %v1026
    %v1148 = vmul.f32 %v1140, %v1026
    %v1149 = vadd.f32 %v1141, %v1027
    %v1150 = vadd.f32 %v1142, %v1027
    %v1151 = vadd.f32 %v1143, %v1027
    %v1152 = vadd.f32 %v1144, %v1027
    %v1153 = vadd.f32 %v1145, %v1027
    %v1154 = vadd.f32 %v1146, %v1027
    %v1155 = vadd.f32 %v1147, %v1027
    %v1156 = vadd.f32 %v1148, %v1027
    %v1157 = vld [vmem:[#allocation3 + $0xc] sm:$0xf]
    %v1158 = vld [vmem:[#allocation3 + $0x34] sm:$0xf]
    %v1159 = vld [vmem:[#allocation3 + $0x5c] sm:$0xf]
    %v1160 = vld [vmem:[#allocation3 + $0x84] sm:$0xf]
    %v1161 = vpack.c.bf16 %v1149, %v1149
    %v1162 = vpack.c.bf16 %v1150, %v1150
    %v1163 = vpack.c.bf16 %v1151, %v1151
    %v1164 = vpack.c.bf16 %v1152, %v1152
    %v1165 = vpack.c.bf16 %v1153, %v1153
    %v1166 = vpack.c.bf16 %v1154, %v1154
    %v1167 = vpack.c.bf16 %v1155, %v1155
    %v1168 = vpack.c.bf16 %v1156, %v1156
    %v1169 = vld [vmem:[%s3 + $0x18] ss:$0 sm:$0xff]
    %v1178 = vunpack.c.l.b16 %v1161
    %v1179 = vunpack.c.l.b16 %v1162
    %v1180 = vunpack.c.l.b16 %v1163
    %v1181 = vunpack.c.l.b16 %v1164
    %v1182 = vunpack.c.l.b16 %v1165
    %v1183 = vunpack.c.l.b16 %v1166
    %v1184 = vunpack.c.l.b16 %v1167
    %v1185 = vunpack.c.l.b16 %v1168
    %v1186 = vrot.slane %v1179, 7
    %v1187 = vsel %vm932, %v1186, %v1178
    %v1188 = vrot.slane %v1180, 6
    %v1189 = vsel %vm934, %v1188, %v1187
    %v1190 = vrot.slane %v1181, 5
    %v1191 = vsel %vm936, %v1190, %v1189
    %v1192 = vrot.slane %v1182, 4
    %v1193 = vsel %vm938, %v1192, %v1191
    %v1194 = vrot.slane %v1183, 3
    %v1195 = vsel %vm940, %v1194, %v1193
    %v1196 = vrot.slane %v1184, 2
    %v1197 = vsel %vm942, %v1196, %v1195
    %v1198 = vrot.slane %v1185, 1
    %v1199 = vsel %vm944, %v1198, %v1197
    %v1200 = vpack.c.b16 %v1199, %v1199
    %v1205 = vunpack.c.l.b16 %v1157
    %v1206 = vunpack.c.l.b16 %v1158
    %v1207 = vunpack.c.l.b16 %v1159
    %v1208 = vunpack.c.l.b16 %v1160
    %v1209 = vpack.c.b16 %v1206, %v1205
    %v1210 = vpack.c.b16 %v1208, %v1207
    %v1214 = vsel %vm248, %v1200, 0
    %1216 = vmatprep.subr.bf16.mxu0 0
    %1217 = vmatpush1.bf16.msra.mxu0 0
    %1218 = vmatprep.subr.bf16.mxu0 0
    %1219 = vmatpush1.bf16.msra.mxu0 0
    %1220 = vmatprep.subr.bf16.mxu0 0
    %1221 = vmatpush1.bf16.msra.mxu0 0
    %1222 = vmatprep.subr.bf16.mxu0 0
    %1223 = vmatpush1.bf16.msra.mxu0 0
    %1224 = vmatprep.subr.bf16.mxu0 0
    %1225 = vmatpush1.bf16.msra.mxu0 0
    %1226 = vmatprep.subr.bf16.mxu0 0
    %1227 = vmatpush1.bf16.msra.mxu0 0
    %1228 = vmatprep.subr.bf16.mxu0 0
    %1229 = vmatpush1.bf16.msra.mxu0 %v1210
    %1230 = vmatprep.subr.bf16.mxu0 0
    %1231 = vmatpush1.bf16.msra.mxu0 %v1209
    %1232 = vmatprep.subr.bf16.mxu0 0
    %1233 = vmatpush2.bf16.msra.mxu0 0
    %1234 = vmatprep.subr.bf16.mxu0 0
    %1235 = vmatpush2.bf16.msra.mxu0 0
    %1236 = vmatprep.subr.bf16.mxu0 0
    %1237 = vmatpush2.bf16.msra.mxu0 0
    %1238 = vmatprep.subr.bf16.mxu0 0
    %1239 = vmatpush2.bf16.msra.mxu0 0
    %1240 = vmatprep.subr.bf16.mxu0 0
    %1241 = vmatpush2.bf16.msra.mxu0 0
    %1242 = vmatprep.subr.bf16.mxu0 0
    %1243 = vmatpush2.bf16.msra.mxu0 0
    %1244 = vmatprep.subr.bf16.mxu0 0
    %1245 = vmatpush2.bf16.msra.mxu0 0
    %1246 = vmatprep.subr.bf16.mxu0 0
    %1247 = vmatpush2.bf16.msra.mxu0 0
    %1248 = vmatprep.mubr.bf16.mxu0 0
    %1249 = vmatmul.mubr.bf16.gmra.mxu0 %v1214
    %v1250 = vpop.f32.mrf.mxu0
    %v1251 = vadd.f32 %v1169, %v1250
    %v1252 = vpop.f32.mrf.mxu0
    %v1253 = vpop.f32.mrf.mxu0
    %v1254 = vpop.f32.mrf.mxu0
    %1255 = vdwg.mxu0
    %v1256 = vmax.f32 %v1251, 0.0
    %v1258 = vrot.slane %v1256, 1
    %v1259 = vrot.slane %v1256, 2
    %v1260 = vrot.slane %v1256, 3
    %v1261 = vrot.slane %v1256, 4
    %v1262 = vrot.slane %v1256, 5
    %v1263 = vrot.slane %v1256, 6
    %v1264 = vrot.slane %v1256, 7
    %v1273 = vadd.f32 %v1149, %v1256
    %v1274 = vadd.f32 %v1150, %v1258
    %v1275 = vadd.f32 %v1151, %v1259
    %v1276 = vadd.f32 %v1152, %v1260
    %v1277 = vadd.f32 %v1153, %v1261
    %v1278 = vadd.f32 %v1154, %v1262
    %v1279 = vadd.f32 %v1155, %v1263
    %v1280 = vadd.f32 %v1156, %v1264
    %v1281 = vld [vmem:[%s3 + $0x3] ss:$0 sm:$0xff]
    %v1282 = vld [vmem:[%s3 + $0x4] ss:$0 sm:$0xff]
    %v1291 = vrot.slane %v1274, 7
    %v1292 = vsel %vm932, %v1291, %v1273
    %v1293 = vrot.slane %v1275, 6
    %v1294 = vsel %vm934, %v1293, %v1292
    %v1295 = vrot.slane %v1276, 5
    %v1296 = vsel %vm936, %v1295, %v1294
    %v1297 = vrot.slane %v1277, 4
    %v1298 = vsel %vm938, %v1297, %v1296
    %v1299 = vrot.slane %v1278, 3
    %v1300 = vsel %vm940, %v1299, %v1298
    %v1301 = vrot.slane %v1279, 2
    %v1302 = vsel %vm942, %v1301, %v1300
    %v1303 = vrot.slane %v1280, 1
    %v1304 = vsel %vm944, %v1303, %v1302
    %v1306 = vsel %vm248, %v1304, 0.0
    %1307 = vadd.xlane.f32.xlu0 %v1306
    %v1308 = vpop.xlane.xlu0 %1307
    %v1309 = vmul.f32 %v1308, %v1054
    %v1311 = vrot.slane %v1309, 1
    %v1312 = vrot.slane %v1309, 2
    %v1313 = vrot.slane %v1309, 3
    %v1314 = vrot.slane %v1309, 4
    %v1315 = vrot.slane %v1309, 5
    %v1316 = vrot.slane %v1309, 6
    %v1317 = vrot.slane %v1309, 7
    %v1326 = vsub.f32 %v1273, %v1309
    %v1327 = vsub.f32 %v1274, %v1311
    %v1328 = vsub.f32 %v1275, %v1312
    %v1329 = vsub.f32 %v1276, %v1313
    %v1330 = vsub.f32 %v1277, %v1314
    %v1331 = vsub.f32 %v1278, %v1315
    %v1332 = vsub.f32 %v1279, %v1316
    %v1333 = vsub.f32 %v1280, %v1317
    %v1334 = vmul.f32 %v1326, %v1326
    %v1335 = vmul.f32 %v1327, %v1327
    %v1336 = vmul.f32 %v1328, %v1328
    %v1337 = vmul.f32 %v1329, %v1329
    %v1338 = vmul.f32 %v1330, %v1330
    %v1339 = vmul.f32 %v1331, %v1331
    %v1340 = vmul.f32 %v1332, %v1332
    %v1341 = vmul.f32 %v1333, %v1333
    %v1350 = vrot.slane %v1335, 7
    %v1351 = vsel %vm932, %v1350, %v1334
    %v1352 = vrot.slane %v1336, 6
    %v1353 = vsel %vm934, %v1352, %v1351
    %v1354 = vrot.slane %v1337, 5
    %v1355 = vsel %vm936, %v1354, %v1353
    %v1356 = vrot.slane %v1338, 4
    %v1357 = vsel %vm938, %v1356, %v1355
    %v1358 = vrot.slane %v1339, 3
    %v1359 = vsel %vm940, %v1358, %v1357
    %v1360 = vrot.slane %v1340, 2
    %v1361 = vsel %vm942, %v1360, %v1359
    %v1362 = vrot.slane %v1341, 1
    %v1363 = vsel %vm944, %v1362, %v1361
    %v1365 = vsel %vm248, %v1363, 0.0
    %1366 = vadd.xlane.f32.xlu0 %v1365
    %v1367 = vpop.xlane.xlu0 %1366
    %v1368 = vmul.f32 %v1367, %v1054
    %v1369 = vadd.f32 %v1368, 1e-05
    %v1370 = vrsqrt.pop %v1369
    %v1372 = vrot.slane %v1370, 1
    %v1373 = vrot.slane %v1370, 2
    %v1374 = vrot.slane %v1370, 3
    %v1375 = vrot.slane %v1370, 4
    %v1376 = vrot.slane %v1370, 5
    %v1377 = vrot.slane %v1370, 6
    %v1378 = vrot.slane %v1370, 7
    %v1387 = vmul.f32 %v1326, %v1370
    %v1388 = vmul.f32 %v1327, %v1372
    %v1389 = vmul.f32 %v1328, %v1373
    %v1390 = vmul.f32 %v1329, %v1374
    %v1391 = vmul.f32 %v1330, %v1375
    %v1392 = vmul.f32 %v1331, %v1376
    %v1393 = vmul.f32 %v1332, %v1377
    %v1394 = vmul.f32 %v1333, %v1378
    %v1395 = vmul.f32 %v1387, %v1281
    %v1396 = vmul.f32 %v1388, %v1281
    %v1397 = vmul.f32 %v1389, %v1281
    %v1398 = vmul.f32 %v1390, %v1281
    %v1399 = vmul.f32 %v1391, %v1281
    %v1400 = vmul.f32 %v1392, %v1281
    %v1401 = vmul.f32 %v1393, %v1281
    %v1402 = vmul.f32 %v1394, %v1281
    %v1403 = vadd.f32 %v1395, %v1282
    %v1404 = vadd.f32 %v1396, %v1282
    %v1405 = vadd.f32 %v1397, %v1282
    %v1406 = vadd.f32 %v1398, %v1282
    %v1407 = vadd.f32 %v1399, %v1282
    %v1408 = vadd.f32 %v1400, %v1282
    %v1409 = vadd.f32 %v1401, %v1282
    %v1410 = vadd.f32 %v1402, %v1282
    %v1419 = vrot.slane %v1404, 7
    %v1420 = vsel %vm932, %v1419, %v1403
    %v1421 = vrot.slane %v1405, 6
    %v1422 = vsel %vm934, %v1421, %v1420
    %v1423 = vrot.slane %v1406, 5
    %v1424 = vsel %vm936, %v1423, %v1422
    %v1425 = vrot.slane %v1407, 4
    %v1426 = vsel %vm938, %v1425, %v1424
    %v1427 = vrot.slane %v1408, 3
    %v1428 = vsel %vm940, %v1427, %v1426
    %v1429 = vrot.slane %v1409, 2
    %v1430 = vsel %vm942, %v1429, %v1428
    %v1431 = vrot.slane %v1410, 1
    %v1432 = vsel %vm944, %v1431, %v1430
    %1435 = vrot.lane.b32.xlu0 %v47, 32
    %v1436 = vpop.permute.xlu0 %1435
    %v1438 = vsel %vm248, %v1432, %v1436
    %v1439 = vld [vmem:[#allocation3 + $0x14] sm:$0xf]
    %v1440 = vld [vmem:[#allocation3 + $0x3c] sm:$0xf]
    %v1441 = vld [vmem:[#allocation3 + $0x64] sm:$0xf]
    %v1442 = vld [vmem:[#allocation3 + $0x8c] sm:$0xf]
    %v1443 = vld [vmem:[#allocation3 + $0xb4] sm:$0xf]
    %v1444 = vld [vmem:[#allocation3 + $0xdc] sm:$0xf]
    %v1445 = vld [vmem:[#allocation3 + $0x104] sm:$0xf]
    %v1446 = vld [vmem:[#allocation3 + $0x12c] sm:$0xf]
    %v1447 = vpack.c.bf16 %v1438, %v1438
    %v1448 = vld [vmem:[%s3 + $0x28] ss:$0 sm:$0xff]
    %v1457 = vunpack.c.l.b16 %v1439
    %v1458 = vunpack.c.l.b16 %v1440
    %v1459 = vunpack.c.l.b16 %v1441
    %v1460 = vunpack.c.l.b16 %v1442
    %v1461 = vunpack.c.l.b16 %v1443
    %v1462 = vunpack.c.l.b16 %v1444
    %v1463 = vunpack.c.l.b16 %v1445
    %v1464 = vunpack.c.l.b16 %v1446
    %v1465 = vpack.c.b16 %v1458, %v1457
    %v1466 = vpack.c.b16 %v1460, %v1459
    %v1467 = vpack.c.b16 %v1462, %v1461
    %v1468 = vpack.c.b16 %v1464, %v1463
    %v1474 = vsel %vm149, %v1447, 0
    %1476 = vmatprep.subr.bf16.mxu0 0
    %1477 = vmatpush1.bf16.msra.mxu0 0
    %1478 = vmatprep.subr.bf16.mxu0 0
    %1479 = vmatpush1.bf16.msra.mxu0 0
    %1480 = vmatprep.subr.bf16.mxu0 0
    %1481 = vmatpush1.bf16.msra.mxu0 0
    %1482 = vmatprep.subr.bf16.mxu0 0
    %1483 = vmatpush1.bf16.msra.mxu0 0
    %1484 = vmatprep.subr.bf16.mxu0 0
    %1485 = vmatpush1.bf16.msra.mxu0 %v1468
    %1486 = vmatprep.subr.bf16.mxu0 0
    %1487 = vmatpush1.bf16.msra.mxu0 %v1467
    %1488 = vmatprep.subr.bf16.mxu0 0
    %1489 = vmatpush1.bf16.msra.mxu0 %v1466
    %1490 = vmatprep.subr.bf16.mxu0 0
    %1491 = vmatpush1.bf16.msra.mxu0 %v1465
    %1492 = vmatprep.subr.bf16.mxu0 0
    %1493 = vmatpush2.bf16.msra.mxu0 0
    %1494 = vmatprep.subr.bf16.mxu0 0
    %1495 = vmatpush2.bf16.msra.mxu0 0
    %1496 = vmatprep.subr.bf16.mxu0 0
    %1497 = vmatpush2.bf16.msra.mxu0 0
    %1498 = vmatprep.subr.bf16.mxu0 0
    %1499 = vmatpush2.bf16.msra.mxu0 0
    %1500 = vmatprep.subr.bf16.mxu0 0
    %1501 = vmatpush2.bf16.msra.mxu0 0
    %1502 = vmatprep.subr.bf16.mxu0 0
    %1503 = vmatpush2.bf16.msra.mxu0 0
    %1504 = vmatprep.subr.bf16.mxu0 0
    %1505 = vmatpush2.bf16.msra.mxu0 0
    %1506 = vmatprep.subr.bf16.mxu0 0
    %1507 = vmatpush2.bf16.msra.mxu0 0
    %1508 = vmatprep.mubr.bf16.mxu0 0
    %1509 = vmatmul.mubr.bf16.gmra.mxu0 %v1474
    %v1510 = vpop.f32.mrf.mxu0
    %v1511 = vadd.f32 %v1448, %v1510
    %v1512 = vpop.f32.mrf.mxu0
    %v1513 = vpop.f32.mrf.mxu0
    %v1514 = vpop.f32.mrf.mxu0
    %1515 = vdwg.mxu0
    %v1516 = vxor.u32 %v1511, 2147483648
    %v1517 = vmul.f32 %v1516, 1.442695
    %v1518 = vpow.pop %v1517
    %v1519 = vadd.f32 %v1518, 1.0
    %v1520 = vrcp.pop %v1519
    %v1521 = vmul.f32 1.0, %v1520
    %1523 = vrot.lane.b32.xlu0 %v1511, 32
    %v1524 = vpop.permute.xlu0 %1523
    %v1526 = vmul.f32 %v1521, %v1524
    %1528 = vrot.lane.b32.xlu0 %v1526, 64
    %v1529 = vpop.permute.xlu0 %1528
    %v1531 = vadd.f32 %v1511, %v1529
    %v1532 = vtanh.pop %v1531
    %v1533 = vsub.f32 1.0, %v1521
    %1535 = vrot.lane.b32.xlu0 %v1532, 96
    %v1536 = vpop.permute.xlu0 %1535
    %v1538 = vmul.f32 %v1533, %v1536
    %v1539 = vmul.f32 %v1521, %v1436
    %v1540 = vadd.f32 %v1538, %v1539
    %1542 = vrot.lane.b32.xlu0 %v1540, 96
    %v1543 = vpop.permute.xlu0 %1542
    %1545 = vst.msk [vmem:[#allocation2] sm:$0xff] %vm248, %v1543
    %v1546 = vld [vmem:[#allocation3 + $0x18] sm:$0xf]
    %v1547 = vld [vmem:[#allocation3 + $0x40] sm:$0xf]
    %v1548 = vld [vmem:[#allocation3 + $0x68] sm:$0xf]
    %v1549 = vld [vmem:[#allocation3 + $0x90] sm:$0xf]
    %v1550 = vpack.c.bf16 %v1540, %v1540
    %v1551 = vld [vmem:[%s3 + $0x30] ss:$0 sm:$0xff]
    %1553 = vrot.lane.b32.xlu0 %v1550, 96
    %v1554 = vpop.permute.xlu0 %1553
    %v1559 = vunpack.c.l.b16 %v1546
    %v1560 = vunpack.c.l.b16 %v1547
    %v1561 = vunpack.c.l.b16 %v1548
    %v1562 = vunpack.c.l.b16 %v1549
    %v1563 = vpack.c.b16 %v1560, %v1559
    %v1564 = vpack.c.b16 %v1562, %v1561
    %v1568 = vsel %vm248, %v1554, 0
    %1570 = vmatprep.subr.bf16.mxu0 0
    %1571 = vmatpush1.bf16.msra.mxu0 0
    %1572 = vmatprep.subr.bf16.mxu0 0
    %1573 = vmatpush1.bf16.msra.mxu0 0
    %1574 = vmatprep.subr.bf16.mxu0 0
    %1575 = vmatpush1.bf16.msra.mxu0 0
    %1576 = vmatprep.subr.bf16.mxu0 0
    %1577 = vmatpush1.bf16.msra.mxu0 0
    %1578 = vmatprep.subr.bf16.mxu0 0
    %1579 = vmatpush1.bf16.msra.mxu0 0
    %1580 = vmatprep.subr.bf16.mxu0 0
    %1581 = vmatpush1.bf16.msra.mxu0 0
    %1582 = vmatprep.subr.bf16.mxu0 0
    %1583 = vmatpush1.bf16.msra.mxu0 %v1564
    %1584 = vmatprep.subr.bf16.mxu0 0
    %1585 = vmatpush1.bf16.msra.mxu0 %v1563
    %1586 = vmatprep.subr.bf16.mxu0 0
    %1587 = vmatpush2.bf16.msra.mxu0 0
    %1588 = vmatprep.subr.bf16.mxu0 0
    %1589 = vmatpush2.bf16.msra.mxu0 0
    %1590 = vmatprep.subr.bf16.mxu0 0
    %1591 = vmatpush2.bf16.msra.mxu0 0
    %1592 = vmatprep.subr.bf16.mxu0 0
    %1593 = vmatpush2.bf16.msra.mxu0 0
    %1594 = vmatprep.subr.bf16.mxu0 0
    %1595 = vmatpush2.bf16.msra.mxu0 0
    %1596 = vmatprep.subr.bf16.mxu0 0
    %1597 = vmatpush2.bf16.msra.mxu0 0
    %1598 = vmatprep.subr.bf16.mxu0 0
    %1599 = vmatpush2.bf16.msra.mxu0 0
    %1600 = vmatprep.subr.bf16.mxu0 0
    %1601 = vmatpush2.bf16.msra.mxu0 0
    %1602 = vmatprep.mubr.bf16.mxu0 0
    %1603 = vmatmul.mubr.bf16.gmra.mxu0 %v1568
    %v1604 = vpop.f32.mrf.mxu0
    %v1605 = vadd.f32 %v1551, %v1604
    %v1606 = vpop.f32.mrf.mxu0
    %v1607 = vpop.f32.mrf.mxu0
    %v1608 = vpop.f32.mrf.mxu0
    %1609 = vdwg.mxu0
    %v1610 = vmax.f32 %v1605, 0.0
    %v1611 = vld [vmem:[#allocation3 + $0x1c] sm:$0xf]
    %v1612 = vld [vmem:[#allocation3 + $0x44] sm:$0xf]
    %v1613 = vld [vmem:[#allocation3 + $0x6c] sm:$0xf]
    %v1614 = vld [vmem:[#allocation3 + $0x94] sm:$0xf]
    %v1615 = vpack.c.bf16 %v1610, %v1610
    %v1616 = vld [vmem:[%s3 + $0x38] ss:$0 sm:$0xff]
    %v1621 = vunpack.c.l.b16 %v1611
    %v1622 = vunpack.c.l.b16 %v1612
    %v1623 = vunpack.c.l.b16 %v1613
    %v1624 = vunpack.c.l.b16 %v1614
    %v1625 = vpack.c.b16 %v1622, %v1621
    %v1626 = vpack.c.b16 %v1624, %v1623
    %v1630 = vsel %vm248, %v1615, 0
    %1632 = vmatprep.subr.bf16.mxu0 0
    %1633 = vmatpush1.bf16.msra.mxu0 0
    %1634 = vmatprep.subr.bf16.mxu0 0
    %1635 = vmatpush1.bf16.msra.mxu0 0
    %1636 = vmatprep.subr.bf16.mxu0 0
    %1637 = vmatpush1.bf16.msra.mxu0 0
    %1638 = vmatprep.subr.bf16.mxu0 0
    %1639 = vmatpush1.bf16.msra.mxu0 0
    %1640 = vmatprep.subr.bf16.mxu0 0
    %1641 = vmatpush1.bf16.msra.mxu0 0
    %1642 = vmatprep.subr.bf16.mxu0 0
    %1643 = vmatpush1.bf16.msra.mxu0 0
    %1644 = vmatprep.subr.bf16.mxu0 0
    %1645 = vmatpush1.bf16.msra.mxu0 %v1626
    %1646 = vmatprep.subr.bf16.mxu0 0
    %1647 = vmatpush1.bf16.msra.mxu0 %v1625
    %1648 = vmatprep.subr.bf16.mxu0 0
    %1649 = vmatpush2.bf16.msra.mxu0 0
    %1650 = vmatprep.subr.bf16.mxu0 0
    %1651 = vmatpush2.bf16.msra.mxu0 0
    %1652 = vmatprep.subr.bf16.mxu0 0
    %1653 = vmatpush2.bf16.msra.mxu0 0
    %1654 = vmatprep.subr.bf16.mxu0 0
    %1655 = vmatpush2.bf16.msra.mxu0 0
    %1656 = vmatprep.subr.bf16.mxu0 0
    %1657 = vmatpush2.bf16.msra.mxu0 0
    %1658 = vmatprep.subr.bf16.mxu0 0
    %1659 = vmatpush2.bf16.msra.mxu0 0
    %1660 = vmatprep.subr.bf16.mxu0 0
    %1661 = vmatpush2.bf16.msra.mxu0 0
    %1662 = vmatprep.subr.bf16.mxu0 0
    %1663 = vmatpush2.bf16.msra.mxu0 0
    %1664 = vmatprep.mubr.bf16.mxu0 0
    %1665 = vmatmul.mubr.bf16.gmra.mxu0 %v1630
    %v1666 = vpop.f32.mrf.mxu0
    %v1667 = vadd.f32 %v1616, %v1666
    %v1668 = vpop.f32.mrf.mxu0
    %v1669 = vpop.f32.mrf.mxu0
    %v1670 = vpop.f32.mrf.mxu0
    %1671 = vdwg.mxu0
    %v1672 = vld [vmem:[#allocation3 + $0x20] sm:$0xf]
    %v1673 = vld [vmem:[#allocation3 + $0x48] sm:$0xf]
    %v1674 = vld [vmem:[#allocation3 + $0x70] sm:$0xf]
    %v1675 = vld [vmem:[#allocation3 + $0x98] sm:$0xf]
    %v1676 = vld [vmem:[%s3 + $0x40] ss:$0 sm:$0xff]
    %v1681 = vunpack.c.l.b16 %v1672
    %v1682 = vunpack.c.l.b16 %v1673
    %v1683 = vunpack.c.l.b16 %v1674
    %v1684 = vunpack.c.l.b16 %v1675
    %v1685 = vpack.c.b16 %v1682, %v1681
    %v1686 = vpack.c.b16 %v1684, %v1683
    %1689 = vmatprep.subr.bf16.mxu0 0
    %1690 = vmatpush1.bf16.msra.mxu0 0
    %1691 = vmatprep.subr.bf16.mxu0 0
    %1692 = vmatpush1.bf16.msra.mxu0 0
    %1693 = vmatprep.subr.bf16.mxu0 0
    %1694 = vmatpush1.bf16.msra.mxu0 0
    %1695 = vmatprep.subr.bf16.mxu0 0
    %1696 = vmatpush1.bf16.msra.mxu0 0
    %1697 = vmatprep.subr.bf16.mxu0 0
    %1698 = vmatpush1.bf16.msra.mxu0 0
    %1699 = vmatprep.subr.bf16.mxu0 0
    %1700 = vmatpush1.bf16.msra.mxu0 0
    %1701 = vmatprep.subr.bf16.mxu0 0
    %1702 = vmatpush1.bf16.msra.mxu0 %v1686
    %1703 = vmatprep.subr.bf16.mxu0 0
    %1704 = vmatpush1.bf16.msra.mxu0 %v1685
    %1705 = vmatprep.subr.bf16.mxu0 0
    %1706 = vmatpush2.bf16.msra.mxu0 0
    %1707 = vmatprep.subr.bf16.mxu0 0
    %1708 = vmatpush2.bf16.msra.mxu0 0
    %1709 = vmatprep.subr.bf16.mxu0 0
    %1710 = vmatpush2.bf16.msra.mxu0 0
    %1711 = vmatprep.subr.bf16.mxu0 0
    %1712 = vmatpush2.bf16.msra.mxu0 0
    %1713 = vmatprep.subr.bf16.mxu0 0
    %1714 = vmatpush2.bf16.msra.mxu0 0
    %1715 = vmatprep.subr.bf16.mxu0 0
    %1716 = vmatpush2.bf16.msra.mxu0 0
    %1717 = vmatprep.subr.bf16.mxu0 0
    %1718 = vmatpush2.bf16.msra.mxu0 0
    %1719 = vmatprep.subr.bf16.mxu0 0
    %1720 = vmatpush2.bf16.msra.mxu0 0
    %1721 = vmatprep.mubr.bf16.mxu0 0
    %1722 = vmatmul.mubr.bf16.gmra.mxu0 %v250
    %v1723 = vpop.f32.mrf.mxu0
    %v1724 = vadd.f32 %v1676, %v1723
    %v1725 = vpop.f32.mrf.mxu0
    %v1726 = vpop.f32.mrf.mxu0
    %v1727 = vadd.f32 %v1676, %v1726
    %v1728 = vpop.f32.mrf.mxu0
    %1729 = vmatprep.mubr.bf16.mxu0 0
    %1730 = vmatmul.mubr.bf16.gmra.mxu0 %v253
    %v1731 = vpop.f32.mrf.mxu0
    %v1732 = vadd.f32 %v1676, %v1731
    %v1733 = vpop.f32.mrf.mxu0
    %v1734 = vpop.f32.mrf.mxu0
    %v1735 = vadd.f32 %v1676, %v1734
    %v1736 = vpop.f32.mrf.mxu0
    %1737 = vmatprep.mubr.bf16.mxu0 0
    %1738 = vmatmul.mubr.bf16.gmra.mxu0 %v256
    %v1739 = vpop.f32.mrf.mxu0
    %v1740 = vadd.f32 %v1676, %v1739
    %v1741 = vpop.f32.mrf.mxu0
    %v1742 = vpop.f32.mrf.mxu0
    %v1743 = vadd.f32 %v1676, %v1742
    %v1744 = vpop.f32.mrf.mxu0
    %1745 = vmatprep.mubr.bf16.mxu0 0
    %1746 = vmatmul.mubr.bf16.gmra.mxu0 %v259
    %v1747 = vpop.f32.mrf.mxu0
    %v1748 = vadd.f32 %v1676, %v1747
    %v1749 = vpop.f32.mrf.mxu0
    %v1750 = vpop.f32.mrf.mxu0
    %v1751 = vadd.f32 %v1676, %v1750
    %v1752 = vpop.f32.mrf.mxu0
    %1753 = vdwg.mxu0
    %v1754 = vmax.f32 %v1724, 0.0
    %v1755 = vmax.f32 %v1727, 0.0
    %v1756 = vmax.f32 %v1732, 0.0
    %v1757 = vmax.f32 %v1735, 0.0
    %v1758 = vmax.f32 %v1740, 0.0
    %v1759 = vmax.f32 %v1743, 0.0
    %v1760 = vmax.f32 %v1748, 0.0
    %v1761 = vmax.f32 %v1751, 0.0
    %v1762 = vld [vmem:[#allocation3 + $0x24] sm:$0xf]
    %v1763 = vld [vmem:[#allocation3 + $0x4c] sm:$0xf]
    %v1764 = vld [vmem:[#allocation3 + $0x74] sm:$0xf]
    %v1765 = vld [vmem:[#allocation3 + $0x9c] sm:$0xf]
    %v1766 = vpack.c.bf16 %v1755, %v1754
    %v1767 = vpack.c.bf16 %v1757, %v1756
    %v1768 = vpack.c.bf16 %v1759, %v1758
    %v1769 = vpack.c.bf16 %v1761, %v1760
    %v1770 = vld [vmem:[%s3 + $0x48] ss:$0 sm:$0xff]
    %v1775 = vunpack.c.l.b16 %v1762
    %v1776 = vunpack.c.l.b16 %v1763
    %v1777 = vunpack.c.l.b16 %v1764
    %v1778 = vunpack.c.l.b16 %v1765
    %v1779 = vpack.c.b16 %v1776, %v1775
    %v1780 = vpack.c.b16 %v1778, %v1777
    %v1784 = vsel %vm248, %v1766, 0
    %v1787 = vsel %vm248, %v1767, 0
    %v1790 = vsel %vm248, %v1768, 0
    %v1793 = vsel %vm248, %v1769, 0
    %1795 = vmatprep.subr.bf16.mxu0 0
    %1796 = vmatpush1.bf16.msra.mxu0 0
    %1797 = vmatprep.subr.bf16.mxu0 0
    %1798 = vmatpush1.bf16.msra.mxu0 0
    %1799 = vmatprep.subr.bf16.mxu0 0
    %1800 = vmatpush1.bf16.msra.mxu0 0
    %1801 = vmatprep.subr.bf16.mxu0 0
    %1802 = vmatpush1.bf16.msra.mxu0 0
    %1803 = vmatprep.subr.bf16.mxu0 0
    %1804 = vmatpush1.bf16.msra.mxu0 0
    %1805 = vmatprep.subr.bf16.mxu0 0
    %1806 = vmatpush1.bf16.msra.mxu0 0
    %1807 = vmatprep.subr.bf16.mxu0 0
    %1808 = vmatpush1.bf16.msra.mxu0 %v1780
    %1809 = vmatprep.subr.bf16.mxu0 0
    %1810 = vmatpush1.bf16.msra.mxu0 %v1779
    %1811 = vmatprep.subr.bf16.mxu0 0
    %1812 = vmatpush2.bf16.msra.mxu0 0
    %1813 = vmatprep.subr.bf16.mxu0 0
    %1814 = vmatpush2.bf16.msra.mxu0 0
    %1815 = vmatprep.subr.bf16.mxu0 0
    %1816 = vmatpush2.bf16.msra.mxu0 0
    %1817 = vmatprep.subr.bf16.mxu0 0
    %1818 = vmatpush2.bf16.msra.mxu0 0
    %1819 = vmatprep.subr.bf16.mxu0 0
    %1820 = vmatpush2.bf16.msra.mxu0 0
    %1821 = vmatprep.subr.bf16.mxu0 0
    %1822 = vmatpush2.bf16.msra.mxu0 0
    %1823 = vmatprep.subr.bf16.mxu0 0
    %1824 = vmatpush2.bf16.msra.mxu0 0
    %1825 = vmatprep.subr.bf16.mxu0 0
    %1826 = vmatpush2.bf16.msra.mxu0 0
    %1827 = vmatprep.mubr.bf16.mxu0 0
    %1828 = vmatmul.mubr.bf16.gmra.mxu0 %v1784
    %v1829 = vpop.f32.mrf.mxu0
    %v1830 = vadd.f32 %v1770, %v1829
    %v1831 = vpop.f32.mrf.mxu0
    %v1832 = vpop.f32.mrf.mxu0
    %v1833 = vadd.f32 %v1770, %v1832
    %v1834 = vpop.f32.mrf.mxu0
    %1835 = vmatprep.mubr.bf16.mxu0 0
    %1836 = vmatmul.mubr.bf16.gmra.mxu0 %v1787
    %v1837 = vpop.f32.mrf.mxu0
    %v1838 = vadd.f32 %v1770, %v1837
    %v1839 = vpop.f32.mrf.mxu0
    %v1840 = vpop.f32.mrf.mxu0
    %v1841 = vadd.f32 %v1770, %v1840
    %v1842 = vpop.f32.mrf.mxu0
    %1843 = vmatprep.mubr.bf16.mxu0 0
    %1844 = vmatmul.mubr.bf16.gmra.mxu0 %v1790
    %v1845 = vpop.f32.mrf.mxu0
    %v1846 = vadd.f32 %v1770, %v1845
    %v1847 = vpop.f32.mrf.mxu0
    %v1848 = vpop.f32.mrf.mxu0
    %v1849 = vadd.f32 %v1770, %v1848
    %v1850 = vpop.f32.mrf.mxu0
    %1851 = vmatprep.mubr.bf16.mxu0 0
    %1852 = vmatmul.mubr.bf16.gmra.mxu0 %v1793
    %v1853 = vpop.f32.mrf.mxu0
    %v1854 = vadd.f32 %v1770, %v1853
    %v1855 = vpop.f32.mrf.mxu0
    %v1856 = vpop.f32.mrf.mxu0
    %v1857 = vadd.f32 %v1770, %v1856
    %v1858 = vpop.f32.mrf.mxu0
    %1859 = vdwg.mxu0
    %v1860 = vlaneseq
    %v1861 = vshrl.u32 %v1860, 7
    %vm1862 = vcmp.ge.s32.totalorder %v1861, 1
    %vm1863 = vcmp.lt.s32.totalorder %v1861, 4
    %vm1864 = vmand %vm1862, %vm1863
    %v1865 = vsel %vm1864, 0.33333334, 0.0
    %v1866 = vmul.f32 %v1830, %v1865
    %v1867 = vmul.f32 %v1833, %v1865
    %v1868 = vmul.f32 %v1838, %v1865
    %v1869 = vmul.f32 %v1841, %v1865
    %v1870 = vmul.f32 %v1846, %v1865
    %v1871 = vmul.f32 %v1849, %v1865
    %v1872 = vmul.f32 %v1854, %v1865
    %v1873 = vmul.f32 %v1857, %v1865
    %v1874 = vsel %vm248, %v1866, 0.0
    %v1875 = vrot.slane %v1874, 4
    %v1876 = vadd.f32 %v1874, %v1875
    %v1877 = vrot.slane %v1876, 2
    %v1878 = vadd.f32 %v1876, %v1877
    %v1879 = vrot.slane %v1878, 1
    %v1880 = vadd.f32 %v1878, %v1879
    %v1881 = vsel %vm248, %v1867, 0.0
    %v1882 = vrot.slane %v1881, 4
    %v1883 = vadd.f32 %v1881, %v1882
    %v1884 = vrot.slane %v1883, 2
    %v1885 = vadd.f32 %v1883, %v1884
    %v1886 = vrot.slane %v1885, 1
    %v1887 = vadd.f32 %v1885, %v1886
    %v1888 = vsel %vm248, %v1868, 0.0
    %v1889 = vrot.slane %v1888, 4
    %v1890 = vadd.f32 %v1888, %v1889
    %v1891 = vrot.slane %v1890, 2
    %v1892 = vadd.f32 %v1890, %v1891
    %v1893 = vrot.slane %v1892, 1
    %v1894 = vadd.f32 %v1892, %v1893
    %v1895 = vsel %vm248, %v1869, 0.0
    %v1896 = vrot.slane %v1895, 4
    %v1897 = vadd.f32 %v1895, %v1896
    %v1898 = vrot.slane %v1897, 2
    %v1899 = vadd.f32 %v1897, %v1898
    %v1900 = vrot.slane %v1899, 1
    %v1901 = vadd.f32 %v1899, %v1900
    %v1902 = vsel %vm248, %v1870, 0.0
    %v1903 = vrot.slane %v1902, 4
    %v1904 = vadd.f32 %v1902, %v1903
    %v1905 = vrot.slane %v1904, 2
    %v1906 = vadd.f32 %v1904, %v1905
    %v1907 = vrot.slane %v1906, 1
    %v1908 = vadd.f32 %v1906, %v1907
    %v1909 = vsel %vm248, %v1871, 0.0
    %v1910 = vrot.slane %v1909, 4
    %v1911 = vadd.f32 %v1909, %v1910
    %v1912 = vrot.slane %v1911, 2
    %v1913 = vadd.f32 %v1911, %v1912
    %v1914 = vrot.slane %v1913, 1
    %v1915 = vadd.f32 %v1913, %v1914
    %v1916 = vsel %vm248, %v1872, 0.0
    %v1917 = vrot.slane %v1916, 4
    %v1918 = vadd.f32 %v1916, %v1917
    %v1919 = vrot.slane %v1918, 2
    %v1920 = vadd.f32 %v1918, %v1919
    %v1921 = vrot.slane %v1920, 1
    %v1922 = vadd.f32 %v1920, %v1921
    %v1923 = vsel %vm248, %v1873, 0.0
    %v1924 = vrot.slane %v1923, 4
    %v1925 = vadd.f32 %v1923, %v1924
    %v1926 = vrot.slane %v1925, 2
    %v1927 = vadd.f32 %v1925, %v1926
    %v1928 = vrot.slane %v1927, 1
    %v1929 = vadd.f32 %v1927, %v1928
    %v1938 = vsel %vm932, %v1887, %v1880
    %v1939 = vsel %vm934, %v1894, %v1938
    %v1940 = vsel %vm936, %v1901, %v1939
    %v1941 = vsel %vm938, %v1908, %v1940
    %v1942 = vsel %vm940, %v1915, %v1941
    %v1943 = vsel %vm942, %v1922, %v1942
    %v1944 = vsel %vm944, %v1929, %v1943
    %v1946 = vadd.f32 %v1667, %v1944
    %v1947 = vsel %vm248, %v1946, %v1540
    %1948 = vst.msk [vmem:[%s4] sm:$0xff] %vm149, %v1947
    // Predicated region
    $region26: #{spectra_forward_seq.1} parent=1 // pred_check
      _
    $region27: #{spectra_forward_seq.1} parent=1 // pred_check_branch
      %1950 = sbr.rel (0) target = $region29
    $region28: #{spectra_forward_seq.1} parent=1 // pred_region
      _
    $region29: #{spectra_forward_seq.1} parent=1 // pred_fallthru
      _
    // Predicated region
    $region30: #{spectra_forward_seq.1} parent=1 // pred_check
      _
    $region31: #{spectra_forward_seq.1} parent=1 // pred_check_branch
      %1952 = sbr.rel (0) target = $region33
    $region32: #{spectra_forward_seq.1} parent=1 // pred_region
      _
    $region33: #{spectra_forward_seq.1} parent=1 // pred_fallthru
      _
    %1953 = vsyncpa [#allocation4], 1

</llo_original>
